<compile_context>
chip_gen: v7x
topology: tpu7x:2x2x1
jax: 0.10.0
libtpu: 0.0.40
codegen_flags: <defaults>
</compile_context>

<pallas_src>
import jax
import jax.numpy as jnp
from jax.experimental import pallas as pl
from jax.experimental.pallas import tpu as pltpu


def _round_up(x, m):
    return ((x + m - 1) // m) * m


def _align_rows(n):
    # Row tiles aligned to 256 (v6e/v7x MXU row granularity), 128 when tiny.
    a = 256 if n >= 256 else 128
    return _round_up(n, a)


def _silu(x):
    # silu(x) = x * sigmoid(x) = 0.5 * x * (1 + tanh(x/2)):
    # exactly one EUP op (tanh) per element instead of exp + full divide.
    return 0.5 * x * (1.0 + jnp.tanh(0.5 * x))


def mlp_stem_kernel(
    x_ref,            # (tm, D_in)       original dtype (cast to bf16 in-kernel)
    w1_ref, b1_ref,   # (D_in, H0) bf16, (1, H0) f32
    w2_ref, b2_ref,   # (H0, H1)   bf16, (1, H1) f32
    g_ref, beta_ref,  # (1, H1) f32,     (1, H1) f32   (LayerNorm affine)
    w3_ref, b3_ref,   # (H1, D_out_p) bf16, (1, D_out_p) f32
    o_ref,            # (tm, D_out_p)
):
    h1_dim = w2_ref.shape[1]

    # Linear 1 (bf16 MXU operands, f32 accumulate) -> SiLU (f32)
    xb = x_ref[...].astype(jnp.bfloat16)
    h = jnp.dot(xb, w1_ref[...], preferred_element_type=jnp.float32)
    h = _silu(h + b1_ref[...])

    # Linear 2 -> LayerNorm (single-pass fused stats, eps=1e-5, biased var,
    # matching nn.LayerNorm) -> SiLU, all statistics in f32.
    h = jnp.dot(h.astype(jnp.bfloat16), w2_ref[...],
                preferred_element_type=jnp.float32) + b2_ref[...]
    inv_n = 1.0 / h1_dim
    s1 = jnp.sum(h, axis=-1, keepdims=True)
    s2 = jnp.sum(h * h, axis=-1, keepdims=True)
    mean = s1 * inv_n
    var = jnp.maximum(s2 * inv_n - mean * mean, 0.0)   # guard vs cancellation
    h = (h - mean) * jax.lax.rsqrt(var + 1e-5)
    h = _silu(h * g_ref[...] + beta_ref[...])

    # Final Linear (lane-dense, zero-padded output columns)
    out = jnp.dot(h.astype(jnp.bfloat16), w3_ref[...],
                  preferred_element_type=jnp.float32) + b3_ref[...]
    o_ref[...] = out.astype(o_ref.dtype)


def mlp_stem_forward(x, params, *, tm=1024):
    """x: array of shape [..., input_dim]; returns [..., output_dim]."""
    w1, b1, w2, b2, g, beta, w3, b3 = params
    d_in, h0 = w1.shape
    h1 = w2.shape[1]
    d_out = w3.shape[1]

    lead_shape = x.shape[:-1]
    m = 1
    for s in lead_shape:
        m *= s

    d_out_p = _round_up(d_out, 128)     # lane-dense output stores

    # --- row-tile selection ------------------------------------------------
    tm = min(tm, _align_rows(m))
    if m >= 1024:
        # Give v7x's two TensorCores at least 2 grid steps to share.
        tm = min(tm, _align_rows(pl.cdiv(m, 2)))

    # --- VMEM budget (v5e scoped default is 16 MiB; v7x physical is 64 MiB) -
    x_isz = jnp.dtype(x.dtype).itemsize
    o_isz = x_isz
    weight_bytes = (2 * (w1.size + w2.size + h1 * d_out_p)        # bf16 weights
                    + 4 * (h0 + 3 * h1 + d_out_p))                # f32 bias/affine

    def vmem_est(t):
        return (weight_bytes
                + 2 * t * d_in * x_isz            # double-buffered input tiles
                + 2 * t * d_out_p * o_isz         # double-buffered output tiles
                + 6 * t * max(h0, h1) * 4)        # live f32 intermediates

    while tm > 256 and vmem_est(tm) > (40 << 20):
        tm = max(256, _round_up(tm // 2, 128))
    vmem_limit = min(64 << 20, max(32 << 20, int(vmem_est(tm) * 1.5)))

    # --- operands -----------------------------------------------------------
    x2d = x.reshape(m, d_in)            # no pad, no pre-cast (done in-kernel)

    w1b = w1.astype(jnp.bfloat16)
    w2b = w2.astype(jnp.bfloat16)
    w3p, b3p = w3, b3
    if d_out_p != d_out:
        w3p = jnp.pad(w3, ((0, 0), (0, d_out_p - d_out)))
        b3p = jnp.pad(b3, ((0, 0), (0, d_out_p - d_out)))
    w3b = w3p.astype(jnp.bfloat16)
    b1f = b1.astype(jnp.float32)
    b2f = b2.astype(jnp.float32)
    gf = g.astype(jnp.float32)
    betaf = beta.astype(jnp.float32)
    b3f = b3p.astype(jnp.float32)

    const = lambda i: (0, 0)

    cost = pl.CostEstimate(
        flops=2 * m * (d_in * h0 + h0 * h1 + h1 * d_out_p),
        transcendentals=m * (h0 + h1 + 1),
        bytes_accessed=(
            x2d.size * x_isz + m * d_out_p * o_isz
            + (w1b.size + w2b.size + w3b.size) * 2
            + (b1f.size + b2f.size + gf.size + betaf.size + b3f.size) * 4
        ),
    )

    def run(weight_mode):
        def wspec(shape):
            if weight_mode is None:
                return pl.BlockSpec(shape, const)
            return pl.BlockSpec(shape, const, pipeline_mode=weight_mode)

        return pl.pallas_call(
            mlp_stem_kernel,
            out_shape=jax.ShapeDtypeStruct((m, d_out_p), x.dtype),
            grid=(pl.cdiv(m, tm),),
            in_specs=[
                pl.BlockSpec((tm, d_in), lambda i: (i, 0)),
                wspec((d_in, h0)), wspec((1, h0)),
                wspec((h0, h1)), wspec((1, h1)),
                wspec((1, h1)), wspec((1, h1)),
                wspec((h1, d_out_p)), wspec((1, d_out_p)),
            ],
            out_specs=pl.BlockSpec((tm, d_out_p), lambda i: (i, 0)),
            compiler_params=pltpu.CompilerParams(
                dimension_semantics=("parallel",),
                vmem_limit_bytes=vmem_limit,
            ),
            cost_estimate=cost,
        )(x2d, w1b, b1f, w2b, b2f, gf, betaf, w3b, b3f)

    try:
        # Weights/biases resident: single-buffered to halve their VMEM.
        out2d = run(pl.Buffered(1))
    except Exception:
        # Fallback if this runtime rejects single-buffered pipeline mode.
        out2d = run(None)

    if d_out_p != d_out:
        out2d = out2d[:, :d_out]
    return out2d.reshape(*lead_shape, d_out)


def init_params(key, input_dim, widths, output_dim, dtype=jnp.float32):
    """Deterministic init mimicking nn.Linear (uniform +-1/sqrt(fan_in)) and
    nn.LayerNorm (gamma=1, beta=0). Weights stored as (in, out)."""
    ks = jax.random.split(key, 6)

    def linear(kw, kb, fan_in, fan_out):
        bound = 1.0 / jnp.sqrt(fan_in)
        w = jax.random.uniform(kw, (fan_in, fan_out), dtype, -bound, bound)
        b = jax.random.uniform(kb, (1, fan_out), dtype, -bound, bound)
        return w, b

    w1, b1 = linear(ks[0], ks[1], input_dim, widths[0])
    w2, b2 = linear(ks[2], ks[3], widths[0], widths[1])
    g = jnp.ones((1, widths[1]), dtype)
    beta = jnp.zeros((1, widths[1]), dtype)
    w3, b3 = linear(ks[4], ks[5], widths[1], output_dim)
    return (w1, b1, w2, b2, g, beta, w3, b3)


def reference_forward(x, params):
    """Pure-JAX f32 reference for sanity checking."""
    w1, b1, w2, b2, g, beta, w3, b3 = params
    h = x @ w1 + b1
    h = h * jax.nn.sigmoid(h)
    h = h @ w2 + b2
    mean = jnp.mean(h, axis=-1, keepdims=True)
    var = jnp.mean(jnp.square(h - mean), axis=-1, keepdims=True)
    h = (h - mean) * jax.lax.rsqrt(var + 1e-5) * g + beta
    h = h * jax.nn.sigmoid(h)
    return h @ w3 + b3


if __name__ == "__main__":
    key = jax.random.PRNGKey(0)
    k_x, k_p = jax.random.split(key)

    # Small shapes consistent with the module: x of shape [B, T, N, input_dim]
    input_dim, widths, output_dim = 16, (32, 32), 16
    B, T, N = 2, 4, 8
    x = jax.random.normal(k_x, (B, T, N, input_dim), jnp.float32)

    params = init_params(k_p, input_dim, widths, output_dim)

    out = mlp_stem_forward(x, params)
    out = jax.block_until_ready(out)

    ref = reference_forward(x, params)
    assert out.shape == (B, T, N, output_dim)
    # bf16 MXU operands (f32 accumulation / LN) -> compare with bf16-level tol.
    assert jnp.allclose(out, ref, atol=5e-2, rtol=5e-2), (
        float(jnp.max(jnp.abs(out - ref))))

    print("KERNEL_OK")
</pallas_src>

<mosaic_0001>
module attributes {stable_mosaic.version = 11 : i64} {
  func.func @mlp_stem_kernel(%arg0: i32, %arg1: memref<128x16xf32, #tpu.memory_space<vmem>>, %arg2: memref<16x32xbf16, #tpu.memory_space<vmem>>, %arg3: memref<1x32xf32, #tpu.memory_space<vmem>>, %arg4: memref<32x32xbf16, #tpu.memory_space<vmem>>, %arg5: memref<1x32xf32, #tpu.memory_space<vmem>>, %arg6: memref<1x32xf32, #tpu.memory_space<vmem>>, %arg7: memref<1x32xf32, #tpu.memory_space<vmem>>, %arg8: memref<32x128xbf16, #tpu.memory_space<vmem>>, %arg9: memref<1x128xf32, #tpu.memory_space<vmem>>, %arg10: memref<128x128xf32, #tpu.memory_space<vmem>>) attributes {dimension_semantics = [#tpu.dimension_semantics<parallel>], iteration_bounds = array<i64: 1>, scalar_prefetch = 0 : i64, scratch_operands = 0 : i64, tpu.core_type = #tpu.core_type<tc>, window_params = [{transform_indices = @transform_0, window_bounds = array<i64: 128, 16>}, {pipeline_mode = #tpu.pipeline_mode<synchronous>, transform_indices = @transform_1, window_bounds = array<i64: 16, 32>}, {pipeline_mode = #tpu.pipeline_mode<synchronous>, transform_indices = @transform_2, window_bounds = array<i64: 1, 32>}, {pipeline_mode = #tpu.pipeline_mode<synchronous>, transform_indices = @transform_3, window_bounds = array<i64: 32, 32>}, {pipeline_mode = #tpu.pipeline_mode<synchronous>, transform_indices = @transform_4, window_bounds = array<i64: 1, 32>}, {pipeline_mode = #tpu.pipeline_mode<synchronous>, transform_indices = @transform_5, window_bounds = array<i64: 1, 32>}, {pipeline_mode = #tpu.pipeline_mode<synchronous>, transform_indices = @transform_6, window_bounds = array<i64: 1, 32>}, {pipeline_mode = #tpu.pipeline_mode<synchronous>, transform_indices = @transform_7, window_bounds = array<i64: 32, 128>}, {pipeline_mode = #tpu.pipeline_mode<synchronous>, transform_indices = @transform_8, window_bounds = array<i64: 1, 128>}, {transform_indices = @transform_9, window_bounds = array<i64: 128, 128>}]} {
    %c0 = arith.constant 0 : index
    %c0_0 = arith.constant 0 : index
    %0 = vector.load %arg1[%c0, %c0_0] : memref<128x16xf32, #tpu.memory_space<vmem>>, vector<128x16xf32>
    %1 = arith.truncf %0 : vector<128x16xf32> to vector<128x16xbf16>
    %c0_1 = arith.constant 0 : index
    %c0_2 = arith.constant 0 : index
    %2 = vector.load %arg2[%c0_1, %c0_2] : memref<16x32xbf16, #tpu.memory_space<vmem>>, vector<16x32xbf16>
    %cst = arith.constant dense<0.000000e+00> : vector<128x32xf32>
    %3 = tpu.matmul %1, %2, %cst {dimension_numbers = #tpu.dot_dimension_numbers<[1], [0], [0], [1], [0, 0, 1, 1], [], []>} : vector<128x16xbf16>, vector<16x32xbf16>, vector<128x32xf32> -> vector<128x32xf32>
    %c0_3 = arith.constant 0 : index
    %c0_4 = arith.constant 0 : index
    %4 = vector.load %arg3[%c0_3, %c0_4] : memref<1x32xf32, #tpu.memory_space<vmem>>, vector<1x32xf32>
    %5 = vector.broadcast %4 : vector<1x32xf32> to vector<128x32xf32>
    %6 = arith.addf %3, %5 : vector<128x32xf32>
    %cst_5 = arith.constant 5.000000e-01 : f32
    %7 = vector.broadcast %cst_5 : f32 to vector<128x32xf32>
    %8 = arith.mulf %7, %6 : vector<128x32xf32>
    %cst_6 = arith.constant 5.000000e-01 : f32
    %9 = vector.broadcast %cst_6 : f32 to vector<128x32xf32>
    %10 = arith.mulf %9, %6 : vector<128x32xf32>
    %11 = math.tanh %10 : vector<128x32xf32>
    %cst_7 = arith.constant 1.000000e+00 : f32
    %12 = vector.broadcast %cst_7 : f32 to vector<128x32xf32>
    %13 = arith.addf %12, %11 : vector<128x32xf32>
    %14 = arith.mulf %8, %13 : vector<128x32xf32>
    %15 = arith.truncf %14 : vector<128x32xf32> to vector<128x32xbf16>
    %c0_8 = arith.constant 0 : index
    %c0_9 = arith.constant 0 : index
    %16 = vector.load %arg4[%c0_8, %c0_9] : memref<32x32xbf16, #tpu.memory_space<vmem>>, vector<32x32xbf16>
    %cst_10 = arith.constant dense<0.000000e+00> : vector<128x32xf32>
    %17 = tpu.matmul %15, %16, %cst_10 {dimension_numbers = #tpu.dot_dimension_numbers<[1], [0], [0], [1], [0, 0, 1, 1], [], []>} : vector<128x32xbf16>, vector<32x32xbf16>, vector<128x32xf32> -> vector<128x32xf32>
    %c0_11 = arith.constant 0 : index
    %c0_12 = arith.constant 0 : index
    %18 = vector.load %arg5[%c0_11, %c0_12] : memref<1x32xf32, #tpu.memory_space<vmem>>, vector<1x32xf32>
    %19 = vector.broadcast %18 : vector<1x32xf32> to vector<128x32xf32>
    %20 = arith.addf %17, %19 : vector<128x32xf32>
    %cst_13 = arith.constant dense<0.000000e+00> : vector<128xf32>
    %21 = vector.multi_reduction <add>, %20, %cst_13 [1] : vector<128x32xf32> to vector<128xf32>
    %22 = vector.shape_cast %21 : vector<128xf32> to vector<128x1xf32>
    %23 = arith.mulf %20, %20 : vector<128x32xf32>
    %cst_14 = arith.constant dense<0.000000e+00> : vector<128xf32>
    %24 = vector.multi_reduction <add>, %23, %cst_14 [1] : vector<128x32xf32> to vector<128xf32>
    %25 = vector.shape_cast %24 : vector<128xf32> to vector<128x1xf32>
    %cst_15 = arith.constant 3.125000e-02 : f32
    %26 = vector.broadcast %cst_15 : f32 to vector<128x1xf32>
    %27 = arith.mulf %22, %26 : vector<128x1xf32>
    %cst_16 = arith.constant 3.125000e-02 : f32
    %28 = vector.broadcast %cst_16 : f32 to vector<128x1xf32>
    %29 = arith.mulf %25, %28 : vector<128x1xf32>
    %30 = arith.mulf %27, %27 : vector<128x1xf32>
    %31 = arith.subf %29, %30 : vector<128x1xf32>
    %cst_17 = arith.constant 0.000000e+00 : f32
    %32 = vector.broadcast %cst_17 : f32 to vector<128x1xf32>
    %33 = arith.maximumf %31, %32 : vector<128x1xf32>
    %34 = vector.broadcast %27 : vector<128x1xf32> to vector<128x32xf32>
    %35 = arith.subf %20, %34 : vector<128x32xf32>
    %cst_18 = arith.constant 9.99999974E-6 : f32
    %36 = vector.broadcast %cst_18 : f32 to vector<128x1xf32>
    %37 = arith.addf %33, %36 : vector<128x1xf32>
    %38 = math.rsqrt %37 : vector<128x1xf32>
    %39 = vector.broadcast %38 : vector<128x1xf32> to vector<128x32xf32>
    %40 = arith.mulf %35, %39 : vector<128x32xf32>
    %c0_19 = arith.constant 0 : index
    %c0_20 = arith.constant 0 : index
    %41 = vector.load %arg6[%c0_19, %c0_20] : memref<1x32xf32, #tpu.memory_space<vmem>>, vector<1x32xf32>
    %42 = vector.broadcast %41 : vector<1x32xf32> to vector<128x32xf32>
    %43 = arith.mulf %40, %42 : vector<128x32xf32>
    %c0_21 = arith.constant 0 : index
    %c0_22 = arith.constant 0 : index
    %44 = vector.load %arg7[%c0_21, %c0_22] : memref<1x32xf32, #tpu.memory_space<vmem>>, vector<1x32xf32>
    %45 = vector.broadcast %44 : vector<1x32xf32> to vector<128x32xf32>
    %46 = arith.addf %43, %45 : vector<128x32xf32>
    %cst_23 = arith.constant 5.000000e-01 : f32
    %47 = vector.broadcast %cst_23 : f32 to vector<128x32xf32>
    %48 = arith.mulf %47, %46 : vector<128x32xf32>
    %cst_24 = arith.constant 5.000000e-01 : f32
    %49 = vector.broadcast %cst_24 : f32 to vector<128x32xf32>
    %50 = arith.mulf %49, %46 : vector<128x32xf32>
    %51 = math.tanh %50 : vector<128x32xf32>
    %cst_25 = arith.constant 1.000000e+00 : f32
    %52 = vector.broadcast %cst_25 : f32 to vector<128x32xf32>
    %53 = arith.addf %52, %51 : vector<128x32xf32>
    %54 = arith.mulf %48, %53 : vector<128x32xf32>
    %55 = arith.truncf %54 : vector<128x32xf32> to vector<128x32xbf16>
    %c0_26 = arith.constant 0 : index
    %c0_27 = arith.constant 0 : index
    %56 = vector.load %arg8[%c0_26, %c0_27] : memref<32x128xbf16, #tpu.memory_space<vmem>>, vector<32x128xbf16>
    %cst_28 = arith.constant dense<0.000000e+00> : vector<128x128xf32>
    %57 = tpu.matmul %55, %56, %cst_28 {dimension_numbers = #tpu.dot_dimension_numbers<[1], [0], [0], [1], [0, 0, 1, 1], [], []>} : vector<128x32xbf16>, vector<32x128xbf16>, vector<128x128xf32> -> vector<128x128xf32>
    %c0_29 = arith.constant 0 : index
    %c0_30 = arith.constant 0 : index
    %58 = vector.load %arg9[%c0_29, %c0_30] : memref<1x128xf32, #tpu.memory_space<vmem>>, vector<1x128xf32>
    %59 = vector.broadcast %58 : vector<1x128xf32> to vector<128x128xf32>
    %60 = arith.addf %57, %59 : vector<128x128xf32>
    %c0_31 = arith.constant 0 : index
    %c0_32 = arith.constant 0 : index
    %61 = vector.load %arg10[%c0_31, %c0_32] : memref<128x128xf32, #tpu.memory_space<vmem>>, vector<128x128xf32>
    tpu.vector_store %arg10[%c0_31, %c0_32], %60 {strides = array<i32>} : memref<128x128xf32, #tpu.memory_space<vmem>>, vector<128x128xf32>,
    return
  }
  func.func @transform_0(%arg0: i32) -> (i32, i32) {
    %c0_i32 = arith.constant 0 : i32
    %c0_i32_0 = arith.constant 0 : i32
    return %arg0, %c0_i32 : i32, i32
  }
  func.func @transform_1(%arg0: i32) -> (i32, i32) {
    %c0_i32 = arith.constant 0 : i32
    %c0_i32_0 = arith.constant 0 : i32
    %c0_i32_1 = arith.constant 0 : i32
    return %c0_i32, %c0_i32_0 : i32, i32
  }
  func.func @transform_2(%arg0: i32) -> (i32, i32) {
    %c0_i32 = arith.constant 0 : i32
    %c0_i32_0 = arith.constant 0 : i32
    %c0_i32_1 = arith.constant 0 : i32
    return %c0_i32, %c0_i32_0 : i32, i32
  }
  func.func @transform_3(%arg0: i32) -> (i32, i32) {
    %c0_i32 = arith.constant 0 : i32
    %c0_i32_0 = arith.constant 0 : i32
    %c0_i32_1 = arith.constant 0 : i32
    return %c0_i32, %c0_i32_0 : i32, i32
  }
  func.func @transform_4(%arg0: i32) -> (i32, i32) {
    %c0_i32 = arith.constant 0 : i32
    %c0_i32_0 = arith.constant 0 : i32
    %c0_i32_1 = arith.constant 0 : i32
    return %c0_i32, %c0_i32_0 : i32, i32
  }
  func.func @transform_5(%arg0: i32) -> (i32, i32) {
    %c0_i32 = arith.constant 0 : i32
    %c0_i32_0 = arith.constant 0 : i32
    %c0_i32_1 = arith.constant 0 : i32
    return %c0_i32, %c0_i32_0 : i32, i32
  }
  func.func @transform_6(%arg0: i32) -> (i32, i32) {
    %c0_i32 = arith.constant 0 : i32
    %c0_i32_0 = arith.constant 0 : i32
    %c0_i32_1 = arith.constant 0 : i32
    return %c0_i32, %c0_i32_0 : i32, i32
  }
  func.func @transform_7(%arg0: i32) -> (i32, i32) {
    %c0_i32 = arith.constant 0 : i32
    %c0_i32_0 = arith.constant 0 : i32
    %c0_i32_1 = arith.constant 0 : i32
    return %c0_i32, %c0_i32_0 : i32, i32
  }
  func.func @transform_8(%arg0: i32) -> (i32, i32) {
    %c0_i32 = arith.constant 0 : i32
    %c0_i32_0 = arith.constant 0 : i32
    %c0_i32_1 = arith.constant 0 : i32
    return %c0_i32, %c0_i32_0 : i32, i32
  }
  func.func @transform_9(%arg0: i32) -> (i32, i32) {
    %c0_i32 = arith.constant 0 : i32
    %c0_i32_0 = arith.constant 0 : i32
    return %arg0, %c0_i32 : i32, i32
  }
}

module attributes {stable_mosaic.version = 11 : i64} {
  func.func @mlp_stem_kernel(%arg0: i32, %arg1: memref<128x16xf32, #tpu.memory_space<vmem>>, %arg2: memref<16x32xbf16, #tpu.memory_space<vmem>>, %arg3: memref<1x32xf32, #tpu.memory_space<vmem>>, %arg4: memref<32x32xbf16, #tpu.memory_space<vmem>>, %arg5: memref<1x32xf32, #tpu.memory_space<vmem>>, %arg6: memref<1x32xf32, #tpu.memory_space<vmem>>, %arg7: memref<1x32xf32, #tpu.memory_space<vmem>>, %arg8: memref<32x128xbf16, #tpu.memory_space<vmem>>, %arg9: memref<1x128xf32, #tpu.memory_space<vmem>>, %arg10: memref<128x128xf32, #tpu.memory_space<vmem>>) attributes {dimension_semantics = [#tpu.dimension_semantics<parallel>], iteration_bounds = array<i64: 1>, scalar_prefetch = 0 : i64, scratch_operands = 0 : i64, tpu.core_type = #tpu.core_type<tc>, window_params = [{transform_indices = @transform_0, window_bounds = array<i64: 128, 16>}, {pipeline_mode = #tpu.pipeline_mode<synchronous>, transform_indices = @transform_1, window_bounds = array<i64: 16, 32>}, {pipeline_mode = #tpu.pipeline_mode<synchronous>, transform_indices = @transform_2, window_bounds = array<i64: 1, 32>}, {pipeline_mode = #tpu.pipeline_mode<synchronous>, transform_indices = @transform_3, window_bounds = array<i64: 32, 32>}, {pipeline_mode = #tpu.pipeline_mode<synchronous>, transform_indices = @transform_4, window_bounds = array<i64: 1, 32>}, {pipeline_mode = #tpu.pipeline_mode<synchronous>, transform_indices = @transform_5, window_bounds = array<i64: 1, 32>}, {pipeline_mode = #tpu.pipeline_mode<synchronous>, transform_indices = @transform_6, window_bounds = array<i64: 1, 32>}, {pipeline_mode = #tpu.pipeline_mode<synchronous>, transform_indices = @transform_7, window_bounds = array<i64: 32, 128>}, {pipeline_mode = #tpu.pipeline_mode<synchronous>, transform_indices = @transform_8, window_bounds = array<i64: 1, 128>}, {transform_indices = @transform_9, window_bounds = array<i64: 128, 128>}]} {
    %c0 = arith.constant 0 : index
    %c0_0 = arith.constant 0 : index
    %0 = vector.load %arg1[%c0, %c0_0] : memref<128x16xf32, #tpu.memory_space<vmem>>, vector<128x16xf32>
    %1 = arith.truncf %0 : vector<128x16xf32> to vector<128x16xbf16>
    %c0_1 = arith.constant 0 : index
    %c0_2 = arith.constant 0 : index
    %2 = vector.load %arg2[%c0_1, %c0_2] : memref<16x32xbf16, #tpu.memory_space<vmem>>, vector<16x32xbf16>
    %cst = arith.constant dense<0.000000e+00> : vector<128x32xf32>
    %3 = tpu.matmul %1, %2, %cst {dimension_numbers = #tpu.dot_dimension_numbers<[1], [0], [0], [1], [0, 0, 1, 1], [], []>} : vector<128x16xbf16>, vector<16x32xbf16>, vector<128x32xf32> -> vector<128x32xf32>
    %c0_3 = arith.constant 0 : index
    %c0_4 = arith.constant 0 : index
    %4 = vector.load %arg3[%c0_3, %c0_4] : memref<1x32xf32, #tpu.memory_space<vmem>>, vector<1x32xf32>
    %5 = vector.broadcast %4 : vector<1x32xf32> to vector<128x32xf32>
    %6 = arith.addf %3, %5 : vector<128x32xf32>
    %cst_5 = arith.constant 5.000000e-01 : f32
    %7 = vector.broadcast %cst_5 : f32 to vector<128x32xf32>
    %8 = arith.mulf %7, %6 : vector<128x32xf32>
    %cst_6 = arith.constant 5.000000e-01 : f32
    %9 = vector.broadcast %cst_6 : f32 to vector<128x32xf32>
    %10 = arith.mulf %9, %6 : vector<128x32xf32>
    %11 = math.tanh %10 : vector<128x32xf32>
    %cst_7 = arith.constant 1.000000e+00 : f32
    %12 = vector.broadcast %cst_7 : f32 to vector<128x32xf32>
    %13 = arith.addf %12, %11 : vector<128x32xf32>
    %14 = arith.mulf %8, %13 : vector<128x32xf32>
    %15 = arith.truncf %14 : vector<128x32xf32> to vector<128x32xbf16>
    %c0_8 = arith.constant 0 : index
    %c0_9 = arith.constant 0 : index
    %16 = vector.load %arg4[%c0_8, %c0_9] : memref<32x32xbf16, #tpu.memory_space<vmem>>, vector<32x32xbf16>
    %cst_10 = arith.constant dense<0.000000e+00> : vector<128x32xf32>
    %17 = tpu.matmul %15, %16, %cst_10 {dimension_numbers = #tpu.dot_dimension_numbers<[1], [0], [0], [1], [0, 0, 1, 1], [], []>} : vector<128x32xbf16>, vector<32x32xbf16>, vector<128x32xf32> -> vector<128x32xf32>
    %c0_11 = arith.constant 0 : index
    %c0_12 = arith.constant 0 : index
    %18 = vector.load %arg5[%c0_11, %c0_12] : memref<1x32xf32, #tpu.memory_space<vmem>>, vector<1x32xf32>
    %19 = vector.broadcast %18 : vector<1x32xf32> to vector<128x32xf32>
    %20 = arith.addf %17, %19 : vector<128x32xf32>
    %cst_13 = arith.constant dense<0.000000e+00> : vector<128xf32>
    %21 = vector.multi_reduction <add>, %20, %cst_13 [1] : vector<128x32xf32> to vector<128xf32>
    %22 = vector.shape_cast %21 : vector<128xf32> to vector<128x1xf32>
    %23 = arith.mulf %20, %20 : vector<128x32xf32>
    %cst_14 = arith.constant dense<0.000000e+00> : vector<128xf32>
    %24 = vector.multi_reduction <add>, %23, %cst_14 [1] : vector<128x32xf32> to vector<128xf32>
    %25 = vector.shape_cast %24 : vector<128xf32> to vector<128x1xf32>
    %cst_15 = arith.constant 3.125000e-02 : f32
    %26 = vector.broadcast %cst_15 : f32 to vector<128x1xf32>
    %27 = arith.mulf %22, %26 : vector<128x1xf32>
    %cst_16 = arith.constant 3.125000e-02 : f32
    %28 = vector.broadcast %cst_16 : f32 to vector<128x1xf32>
    %29 = arith.mulf %25, %28 : vector<128x1xf32>
    %30 = arith.mulf %27, %27 : vector<128x1xf32>
    %31 = arith.subf %29, %30 : vector<128x1xf32>
    %cst_17 = arith.constant 0.000000e+00 : f32
    %32 = vector.broadcast %cst_17 : f32 to vector<128x1xf32>
    %33 = arith.maximumf %31, %32 : vector<128x1xf32>
    %34 = vector.broadcast %27 : vector<128x1xf32> to vector<128x32xf32>
    %35 = arith.subf %20, %34 : vector<128x32xf32>
    %cst_18 = arith.constant 9.99999974E-6 : f32
    %36 = vector.broadcast %cst_18 : f32 to vector<128x1xf32>
    %37 = arith.addf %33, %36 : vector<128x1xf32>
    %38 = math.rsqrt %37 : vector<128x1xf32>
    %39 = vector.broadcast %38 : vector<128x1xf32> to vector<128x32xf32>
    %40 = arith.mulf %35, %39 : vector<128x32xf32>
    %c0_19 = arith.constant 0 : index
    %c0_20 = arith.constant 0 : index
    %41 = vector.load %arg6[%c0_19, %c0_20] : memref<1x32xf32, #tpu.memory_space<vmem>>, vector<1x32xf32>
    %42 = vector.broadcast %41 : vector<1x32xf32> to vector<128x32xf32>
    %43 = arith.mulf %40, %42 : vector<128x32xf32>
    %c0_21 = arith.constant 0 : index
    %c0_22 = arith.constant 0 : index
    %44 = vector.load %arg7[%c0_21, %c0_22] : memref<1x32xf32, #tpu.memory_space<vmem>>, vector<1x32xf32>
    %45 = vector.broadcast %44 : vector<1x32xf32> to vector<128x32xf32>
    %46 = arith.addf %43, %45 : vector<128x32xf32>
    %cst_23 = arith.constant 5.000000e-01 : f32
    %47 = vector.broadcast %cst_23 : f32 to vector<128x32xf32>
    %48 = arith.mulf %47, %46 : vector<128x32xf32>
    %cst_24 = arith.constant 5.000000e-01 : f32
    %49 = vector.broadcast %cst_24 : f32 to vector<128x32xf32>
    %50 = arith.mulf %49, %46 : vector<128x32xf32>
    %51 = math.tanh %50 : vector<128x32xf32>
    %cst_25 = arith.constant 1.000000e+00 : f32
    %52 = vector.broadcast %cst_25 : f32 to vector<128x32xf32>
    %53 = arith.addf %52, %51 : vector<128x32xf32>
    %54 = arith.mulf %48, %53 : vector<128x32xf32>
    %55 = arith.truncf %54 : vector<128x32xf32> to vector<128x32xbf16>
    %c0_26 = arith.constant 0 : index
    %c0_27 = arith.constant 0 : index
    %56 = vector.load %arg8[%c0_26, %c0_27] : memref<32x128xbf16, #tpu.memory_space<vmem>>, vector<32x128xbf16>
    %cst_28 = arith.constant dense<0.000000e+00> : vector<128x128xf32>
    %57 = tpu.matmul %55, %56, %cst_28 {dimension_numbers = #tpu.dot_dimension_numbers<[1], [0], [0], [1], [0, 0, 1, 1], [], []>} : vector<128x32xbf16>, vector<32x128xbf16>, vector<128x128xf32> -> vector<128x128xf32>
    %c0_29 = arith.constant 0 : index
    %c0_30 = arith.constant 0 : index
    %58 = vector.load %arg9[%c0_29, %c0_30] : memref<1x128xf32, #tpu.memory_space<vmem>>, vector<1x128xf32>
    %59 = vector.broadcast %58 : vector<1x128xf32> to vector<128x128xf32>
    %60 = arith.addf %57, %59 : vector<128x128xf32>
    %c0_31 = arith.constant 0 : index
    %c0_32 = arith.constant 0 : index
    %61 = vector.load %arg10[%c0_31, %c0_32] : memref<128x128xf32, #tpu.memory_space<vmem>>, vector<128x128xf32>
    tpu.vector_store %arg10[%c0_31, %c0_32], %60 {strides = array<i32>} : memref<128x128xf32, #tpu.memory_space<vmem>>, vector<128x128xf32>,
    return
  }
  func.func @transform_0(%arg0: i32) -> (i32, i32) {
    %c0_i32 = arith.constant 0 : i32
    %c0_i32_0 = arith.constant 0 : i32
    return %arg0, %c0_i32 : i32, i32
  }
  func.func @transform_1(%arg0: i32) -> (i32, i32) {
    %c0_i32 = arith.constant 0 : i32
    %c0_i32_0 = arith.constant 0 : i32
    %c0_i32_1 = arith.constant 0 : i32
    return %c0_i32, %c0_i32_0 : i32, i32
  }
  func.func @transform_2(%arg0: i32) -> (i32, i32) {
    %c0_i32 = arith.constant 0 : i32
    %c0_i32_0 = arith.constant 0 : i32
    %c0_i32_1 = arith.constant 0 : i32
    return %c0_i32, %c0_i32_0 : i32, i32
  }
  func.func @transform_3(%arg0: i32) -> (i32, i32) {
    %c0_i32 = arith.constant 0 : i32
    %c0_i32_0 = arith.constant 0 : i32
    %c0_i32_1 = arith.constant 0 : i32
    return %c0_i32, %c0_i32_0 : i32, i32
  }
  func.func @transform_4(%arg0: i32) -> (i32, i32) {
    %c0_i32 = arith.constant 0 : i32
    %c0_i32_0 = arith.constant 0 : i32
    %c0_i32_1 = arith.constant 0 : i32
    return %c0_i32, %c0_i32_0 : i32, i32
  }
  func.func @transform_5(%arg0: i32) -> (i32, i32) {
    %c0_i32 = arith.constant 0 : i32
    %c0_i32_0 = arith.constant 0 : i32
    %c0_i32_1 = arith.constant 0 : i32
    return %c0_i32, %c0_i32_0 : i32, i32
  }
  func.func @transform_6(%arg0: i32) -> (i32, i32) {
    %c0_i32 = arith.constant 0 : i32
    %c0_i32_0 = arith.constant 0 : i32
    %c0_i32_1 = arith.constant 0 : i32
    return %c0_i32, %c0_i32_0 : i32, i32
  }
  func.func @transform_7(%arg0: i32) -> (i32, i32) {
    %c0_i32 = arith.constant 0 : i32
    %c0_i32_0 = arith.constant 0 : i32
    %c0_i32_1 = arith.constant 0 : i32
    return %c0_i32, %c0_i32_0 : i32, i32
  }
  func.func @transform_8(%arg0: i32) -> (i32, i32) {
    %c0_i32 = arith.constant 0 : i32
    %c0_i32_0 = arith.constant 0 : i32
    %c0_i32_1 = arith.constant 0 : i32
    return %c0_i32, %c0_i32_0 : i32, i32
  }
  func.func @transform_9(%arg0: i32) -> (i32, i32) {
    %c0_i32 = arith.constant 0 : i32
    %c0_i32_0 = arith.constant 0 : i32
    return %arg0, %c0_i32 : i32, i32
  }
}

</mosaic_0001>

<llo_original>
// kernel: tpu_custom_call.1
$region0: #{tpu_custom_call.1}
  #allocation0 [shape = 'u32[]', space=smem, size = 0x4, offset = 0x4, fixed_abs, tag = 'smem constant byte address 0x4 - core index']
  #allocation1 [shape = 'u32[144,128]{1,0:T(1,128)}', space=vmem, size = 0x12000, scoped, tag = 'internal scratch']
  %s0 = inlined_call_operand.vmem [shape: f32[64,16], index: 0, kind: input, shape index: {}]
  %s1 = inlined_call_operand.vmem [shape: bf16[16,32], index: 1, kind: input, shape index: {}]
  %s2 = inlined_call_operand.vmem [shape: f32[1,32], index: 2, kind: input, shape index: {}]
  %s3 = inlined_call_operand.vmem [shape: bf16[32,32], index: 3, kind: input, shape index: {}]
  %s4 = inlined_call_operand.vmem [shape: f32[1,32], index: 4, kind: input, shape index: {}]
  %s5 = inlined_call_operand.vmem [shape: f32[1,32], index: 5, kind: input, shape index: {}]
  %s6 = inlined_call_operand.vmem [shape: f32[1,32], index: 6, kind: input, shape index: {}]
  %s7 = inlined_call_operand.vmem [shape: bf16[32,128], index: 7, kind: input, shape index: {}]
  %s8 = inlined_call_operand.vmem [shape: f32[1,128], index: 8, kind: input, shape index: {}]
  %s9 = inlined_call_operand.hbm [shape: f32[64,128], index: 9, kind: output, shape index: {}]
  %s10 = sld [smem:[#allocation0]]
  $region46: #{tpu_custom_call.1} parent=0
    _
  %s12 = ssub.s32 1, %s10
  %s13 = scalar_select 0, %s12, %s10
  $region1: #{tpu_custom_call.1} parent=0
    #allocation2 [shape = 'u8[65536]{0}', space=vmem, size = 0x10000, scoped, tag = 'output window, operand 0, single buffered']
    #allocation3 [shape = 's32[1]{0}', space=sflag, size = 0x4, scoped, tag = 'scoped memory for tpu_custom_call.1']
    %14 = vsyncpa [#allocation3], 0
    // Predicated region
    $region2: #{tpu_custom_call.1} parent=1 // pred_check
      _
    $region3: #{tpu_custom_call.1} parent=1 // pred_check_branch
      %16 = sbr.rel (0) target = $region5
    $region4: #{tpu_custom_call.1} parent=1 // pred_region
      _
    $region5: #{tpu_custom_call.1} parent=1 // pred_fallthru
      _
    // Predicated region
    $region6: #{tpu_custom_call.1} parent=1 // pred_check
      _
    $region7: #{tpu_custom_call.1} parent=1 // pred_check_branch
      %18 = sbr.rel (0) target = $region9
    $region8: #{tpu_custom_call.1} parent=1 // pred_region
      _
    $region9: #{tpu_custom_call.1} parent=1 // pred_fallthru
      _
    // Predicated region
    $region10: #{tpu_custom_call.1} parent=1 // pred_check
      _
    $region11: #{tpu_custom_call.1} parent=1 // pred_check_branch
      %20 = sbr.rel (0) target = $region13
    $region12: #{tpu_custom_call.1} parent=1 // pred_region
      _
    $region13: #{tpu_custom_call.1} parent=1 // pred_fallthru
      _
    // Predicated region
    $region14: #{tpu_custom_call.1} parent=1 // pred_check
      _
    $region15: #{tpu_custom_call.1} parent=1 // pred_check_branch
      %22 = sbr.rel (0) target = $region17
    $region16: #{tpu_custom_call.1} parent=1 // pred_region
      _
    $region17: #{tpu_custom_call.1} parent=1 // pred_fallthru
      _
    // Predicated region
    $region18: #{tpu_custom_call.1} parent=1 // pred_check
      _
    $region19: #{tpu_custom_call.1} parent=1 // pred_check_branch
      %24 = sbr.rel (0) target = $region21
    $region20: #{tpu_custom_call.1} parent=1 // pred_region
      _
    $region21: #{tpu_custom_call.1} parent=1 // pred_fallthru
      _
    // Predicated region
    $region22: #{tpu_custom_call.1} parent=1 // pred_check
      _
    $region23: #{tpu_custom_call.1} parent=1 // pred_check_branch
      %26 = sbr.rel (0) target = $region25
    $region24: #{tpu_custom_call.1} parent=1 // pred_region
      _
    $region25: #{tpu_custom_call.1} parent=1 // pred_fallthru
      _
    // Predicated region
    $region26: #{tpu_custom_call.1} parent=1 // pred_check
      _
    $region27: #{tpu_custom_call.1} parent=1 // pred_check_branch
      %28 = sbr.rel (0) target = $region29
    $region28: #{tpu_custom_call.1} parent=1 // pred_region
      _
    $region29: #{tpu_custom_call.1} parent=1 // pred_fallthru
      _
    // Predicated region
    $region30: #{tpu_custom_call.1} parent=1 // pred_check
      _
    $region31: #{tpu_custom_call.1} parent=1 // pred_check_branch
      %30 = sbr.rel (0) target = $region33
    $region32: #{tpu_custom_call.1} parent=1 // pred_region
      _
    $region33: #{tpu_custom_call.1} parent=1 // pred_fallthru
      _
    // Predicated region
    $region34: #{tpu_custom_call.1} parent=1 // pred_check
      _
    $region35: #{tpu_custom_call.1} parent=1 // pred_check_branch
      %32 = sbr.rel (0) target = $region37
    $region36: #{tpu_custom_call.1} parent=1 // pred_region
      _
    $region37: #{tpu_custom_call.1} parent=1 // pred_fallthru
      _
    %v34 = vld [vmem:[%s0] sm:$0xff]
    %v35 = vld [vmem:[%s0 + $0x8] sm:$0xff]
    %v36 = vld [vmem:[%s0 + $0x10] sm:$0xff]
    %v37 = vld [vmem:[%s0 + $0x18] sm:$0xff]
    %v38 = vld [vmem:[%s0 + $0x20] sm:$0xff]
    %v39 = vld [vmem:[%s0 + $0x28] sm:$0xff]
    %v40 = vld [vmem:[%s0 + $0x30] sm:$0xff]
    %v41 = vld [vmem:[%s0 + $0x38] sm:$0xff]
    %v42 = vld [vmem:[%s0 + $0x40] sm:$0xff]
    %v43 = vld [vmem:[%s0 + $0x48] sm:$0xff]
    %v44 = vld [vmem:[%s0 + $0x50] sm:$0xff]
    %v45 = vld [vmem:[%s0 + $0x58] sm:$0xff]
    %v46 = vld [vmem:[%s0 + $0x60] sm:$0xff]
    %v47 = vld [vmem:[%s0 + $0x68] sm:$0xff]
    %v48 = vld [vmem:[%s0 + $0x70] sm:$0xff]
    %v49 = vld [vmem:[%s0 + $0x78] sm:$0xff]
    %v50 = vpack.c.bf16 %v35, %v34
    %v51 = vpack.c.bf16 %v37, %v36
    %v52 = vpack.c.bf16 %v39, %v38
    %v53 = vpack.c.bf16 %v41, %v40
    %v54 = vpack.c.bf16 %v43, %v42
    %v55 = vpack.c.bf16 %v45, %v44
    %v56 = vpack.c.bf16 %v47, %v46
    %v57 = vpack.c.bf16 %v49, %v48
    %v58 = vld [vmem:[%s1] sm:$0xf]
    %v59 = vld [vmem:[%s1 + $0x4] sm:$0xf]
    %v60 = vld [vmem:[%s2] sm:$0x1]
    %v62 = vlaneseq
    %v63 = vshrl.u32 %v62, 7
    %v64 = vsub.s32 0, %v63
    %v65 = vrot.slane %v60, %v64
    %v69 = vunpack.c.l.b16 %v58
    %v70 = vunpack.c.l.b16 %v59
    %v71 = vpack.c.b16 %v70, %v69
    %vm73 = vcmask 130048
    %v75 = vsel %vm73, %v50, 0
    %v78 = vsel %vm73, %v51, 0
    %v81 = vsel %vm73, %v52, 0
    %v84 = vsel %vm73, %v53, 0
    %v87 = vsel %vm73, %v54, 0
    %v90 = vsel %vm73, %v55, 0
    %v93 = vsel %vm73, %v56, 0
    %v96 = vsel %vm73, %v57, 0
    %98 = vmatprep.subr.bf16.mxu0 0
    %99 = vmatpush1.bf16.msra.mxu0 %v71
    %100 = vmatprep.subr.bf16.mxu0 0
    %101 = vmatpush1.bf16.msra.mxu0 0
    %102 = vmatprep.subr.bf16.mxu0 0
    %103 = vmatpush1.bf16.msra.mxu0 0
    %104 = vmatprep.subr.bf16.mxu0 0
    %105 = vmatpush1.bf16.msra.mxu0 0
    %106 = vmatprep.subr.bf16.mxu0 0
    %107 = vmatpush1.bf16.msra.mxu0 0
    %108 = vmatprep.subr.bf16.mxu0 0
    %109 = vmatpush1.bf16.msra.mxu0 0
    %110 = vmatprep.subr.bf16.mxu0 0
    %111 = vmatpush1.bf16.msra.mxu0 0
    %112 = vmatprep.subr.bf16.mxu0 0
    %113 = vmatpush1.bf16.msra.mxu0 0
    %114 = vmatprep.subr.bf16.mxu0 0
    %115 = vmatpush1.bf16.msra.mxu0 0
    %116 = vmatprep.subr.bf16.mxu0 0
    %117 = vmatpush1.bf16.msra.mxu0 0
    %118 = vmatprep.subr.bf16.mxu0 0
    %119 = vmatpush1.bf16.msra.mxu0 0
    %120 = vmatprep.subr.bf16.mxu0 0
    %121 = vmatpush1.bf16.msra.mxu0 0
    %122 = vmatprep.subr.bf16.mxu0 0
    %123 = vmatpush1.bf16.msra.mxu0 0
    %124 = vmatprep.subr.bf16.mxu0 0
    %125 = vmatpush1.bf16.msra.mxu0 0
    %126 = vmatprep.subr.bf16.mxu0 0
    %127 = vmatpush1.bf16.msra.mxu0 0
    %128 = vmatprep.subr.bf16.mxu0 0
    %129 = vmatpush1.bf16.msra.mxu0 0
    %130 = vmatprep.mubr.bf16.mxu0 0
    %131 = vmatmul.mubr.bf16.gmra.mrb[0].mxu0 %v75
    %v132 = vpop.f32.mrb[0].mxu0
    %v133 = vadd.f32 %v65, %v132
    %v134 = vpop.f32.mrb[0].mxu0
    %v135 = vpop.f32.mrb[0].mxu0
    %v136 = vadd.f32 %v65, %v135
    %v137 = vpop.f32.mrb[0].mxu0
    %138 = vmatprep.mubr.bf16.mxu0 0
    %139 = vmatmul.mubr.bf16.gmra.mrb[0].mxu0 %v78
    %v140 = vpop.f32.mrb[0].mxu0
    %v141 = vadd.f32 %v65, %v140
    %v142 = vpop.f32.mrb[0].mxu0
    %v143 = vpop.f32.mrb[0].mxu0
    %v144 = vadd.f32 %v65, %v143
    %v145 = vpop.f32.mrb[0].mxu0
    %146 = vmatprep.mubr.bf16.mxu0 0
    %147 = vmatmul.mubr.bf16.gmra.mrb[0].mxu0 %v81
    %v148 = vpop.f32.mrb[0].mxu0
    %v149 = vadd.f32 %v65, %v148
    %v150 = vpop.f32.mrb[0].mxu0
    %v151 = vpop.f32.mrb[0].mxu0
    %v152 = vadd.f32 %v65, %v151
    %v153 = vpop.f32.mrb[0].mxu0
    %154 = vmatprep.mubr.bf16.mxu0 0
    %155 = vmatmul.mubr.bf16.gmra.mrb[0].mxu0 %v84
    %v156 = vpop.f32.mrb[0].mxu0
    %v157 = vadd.f32 %v65, %v156
    %v158 = vpop.f32.mrb[0].mxu0
    %v159 = vpop.f32.mrb[0].mxu0
    %v160 = vadd.f32 %v65, %v159
    %v161 = vpop.f32.mrb[0].mxu0
    %162 = vmatprep.mubr.bf16.mxu0 0
    %163 = vmatmul.mubr.bf16.gmra.mrb[0].mxu0 %v87
    %v164 = vpop.f32.mrb[0].mxu0
    %v165 = vadd.f32 %v65, %v164
    %v166 = vpop.f32.mrb[0].mxu0
    %v167 = vpop.f32.mrb[0].mxu0
    %v168 = vadd.f32 %v65, %v167
    %v169 = vpop.f32.mrb[0].mxu0
    %170 = vmatprep.mubr.bf16.mxu0 0
    %171 = vmatmul.mubr.bf16.gmra.mrb[0].mxu0 %v90
    %v172 = vpop.f32.mrb[0].mxu0
    %v173 = vadd.f32 %v65, %v172
    %v174 = vpop.f32.mrb[0].mxu0
    %v175 = vpop.f32.mrb[0].mxu0
    %v176 = vadd.f32 %v65, %v175
    %v177 = vpop.f32.mrb[0].mxu0
    %178 = vmatprep.mubr.bf16.mxu0 0
    %179 = vmatmul.mubr.bf16.gmra.mrb[0].mxu0 %v93
    %v180 = vpop.f32.mrb[0].mxu0
    %v181 = vadd.f32 %v65, %v180
    %v182 = vpop.f32.mrb[0].mxu0
    %v183 = vpop.f32.mrb[0].mxu0
    %v184 = vadd.f32 %v65, %v183
    %v185 = vpop.f32.mrb[0].mxu0
    %186 = vmatprep.mubr.bf16.mxu0 0
    %187 = vmatmul.mubr.bf16.gmra.mrb[0].mxu0 %v96
    %v188 = vpop.f32.mrb[0].mxu0
    %v189 = vadd.f32 %v65, %v188
    %v190 = vpop.f32.mrb[0].mxu0
    %v191 = vpop.f32.mrb[0].mxu0
    %v192 = vadd.f32 %v65, %v191
    %v193 = vpop.f32.mrb[0].mxu0
    %194 = vdwg.mxu0
    %v195 = vmul.f32 %v133, 0.5
    %v196 = vmul.f32 %v136, 0.5
    %v197 = vmul.f32 %v141, 0.5
    %v198 = vmul.f32 %v144, 0.5
    %v199 = vmul.f32 %v149, 0.5
    %v200 = vmul.f32 %v152, 0.5
    %v201 = vmul.f32 %v157, 0.5
    %v202 = vmul.f32 %v160, 0.5
    %v203 = vmul.f32 %v165, 0.5
    %v204 = vmul.f32 %v168, 0.5
    %v205 = vmul.f32 %v173, 0.5
    %v206 = vmul.f32 %v176, 0.5
    %v207 = vmul.f32 %v181, 0.5
    %v208 = vmul.f32 %v184, 0.5
    %v209 = vmul.f32 %v189, 0.5
    %v210 = vmul.f32 %v192, 0.5
    %v211 = vtanh.pop %v195
    %v212 = vtanh.pop %v196
    %v213 = vtanh.pop %v197
    %v214 = vtanh.pop %v198
    %v215 = vtanh.pop %v199
    %v216 = vtanh.pop %v200
    %v217 = vtanh.pop %v201
    %v218 = vtanh.pop %v202
    %v219 = vtanh.pop %v203
    %v220 = vtanh.pop %v204
    %v221 = vtanh.pop %v205
    %v222 = vtanh.pop %v206
    %v223 = vtanh.pop %v207
    %v224 = vtanh.pop %v208
    %v225 = vtanh.pop %v209
    %v226 = vtanh.pop %v210
    %v227 = vadd.f32 %v211, 1.0
    %v228 = vadd.f32 %v212, 1.0
    %v229 = vadd.f32 %v213, 1.0
    %v230 = vadd.f32 %v214, 1.0
    %v231 = vadd.f32 %v215, 1.0
    %v232 = vadd.f32 %v216, 1.0
    %v233 = vadd.f32 %v217, 1.0
    %v234 = vadd.f32 %v218, 1.0
    %v235 = vadd.f32 %v219, 1.0
    %v236 = vadd.f32 %v220, 1.0
    %v237 = vadd.f32 %v221, 1.0
    %v238 = vadd.f32 %v222, 1.0
    %v239 = vadd.f32 %v223, 1.0
    %v240 = vadd.f32 %v224, 1.0
    %v241 = vadd.f32 %v225, 1.0
    %v242 = vadd.f32 %v226, 1.0
    %v243 = vmul.f32 %v195, %v227
    %v244 = vmul.f32 %v196, %v228
    %v245 = vmul.f32 %v197, %v229
    %v246 = vmul.f32 %v198, %v230
    %v247 = vmul.f32 %v199, %v231
    %v248 = vmul.f32 %v200, %v232
    %v249 = vmul.f32 %v201, %v233
    %v250 = vmul.f32 %v202, %v234
    %v251 = vmul.f32 %v203, %v235
    %v252 = vmul.f32 %v204, %v236
    %v253 = vmul.f32 %v205, %v237
    %v254 = vmul.f32 %v206, %v238
    %v255 = vmul.f32 %v207, %v239
    %v256 = vmul.f32 %v208, %v240
    %v257 = vmul.f32 %v209, %v241
    %v258 = vmul.f32 %v210, %v242
    %v259 = vpack.c.bf16 %v244, %v243
    %v260 = vpack.c.bf16 %v246, %v245
    %v261 = vpack.c.bf16 %v248, %v247
    %v262 = vpack.c.bf16 %v250, %v249
    %v263 = vpack.c.bf16 %v252, %v251
    %v264 = vpack.c.bf16 %v254, %v253
    %v265 = vpack.c.bf16 %v256, %v255
    %v266 = vpack.c.bf16 %v258, %v257
    %v267 = vld [vmem:[%s3] sm:$0xf]
    %v268 = vld [vmem:[%s3 + $0x4] sm:$0xf]
    %v269 = vld [vmem:[%s3 + $0x8] sm:$0xf]
    %v270 = vld [vmem:[%s3 + $0xc] sm:$0xf]
    %v271 = vld [vmem:[%s4] sm:$0x1]
    %v273 = vlaneseq
    %v274 = vshrl.u32 %v273, 7
    %v275 = vsub.s32 0, %v274
    %v276 = vrot.slane %v271, %v275
    %v282 = vunpack.c.l.b16 %v267
    %v283 = vunpack.c.l.b16 %v268
    %v284 = vunpack.c.l.b16 %v269
    %v285 = vunpack.c.l.b16 %v270
    %v286 = vpack.c.b16 %v283, %v282
    %v287 = vpack.c.b16 %v285, %v284
    %vm290 = vcmask 261120
    %v292 = vsel %vm290, %v259, 0
    %v295 = vsel %vm290, %v260, 0
    %v298 = vsel %vm290, %v261, 0
    %v301 = vsel %vm290, %v262, 0
    %v304 = vsel %vm290, %v263, 0
    %v307 = vsel %vm290, %v264, 0
    %v310 = vsel %vm290, %v265, 0
    %v313 = vsel %vm290, %v266, 0
    %315 = vmatprep.subr.bf16.mxu0 0
    %316 = vmatpush1.bf16.msra.mxu0 %v286
    %317 = vmatprep.subr.bf16.mxu0 0
    %318 = vmatpush1.bf16.msra.mxu0 %v287
    %319 = vmatprep.subr.bf16.mxu0 0
    %320 = vmatpush1.bf16.msra.mxu0 0
    %321 = vmatprep.subr.bf16.mxu0 0
    %322 = vmatpush1.bf16.msra.mxu0 0
    %323 = vmatprep.subr.bf16.mxu0 0
    %324 = vmatpush1.bf16.msra.mxu0 0
    %325 = vmatprep.subr.bf16.mxu0 0
    %326 = vmatpush1.bf16.msra.mxu0 0
    %327 = vmatprep.subr.bf16.mxu0 0
    %328 = vmatpush1.bf16.msra.mxu0 0
    %329 = vmatprep.subr.bf16.mxu0 0
    %330 = vmatpush1.bf16.msra.mxu0 0
    %331 = vmatprep.subr.bf16.mxu0 0
    %332 = vmatpush1.bf16.msra.mxu0 0
    %333 = vmatprep.subr.bf16.mxu0 0
    %334 = vmatpush1.bf16.msra.mxu0 0
    %335 = vmatprep.subr.bf16.mxu0 0
    %336 = vmatpush1.bf16.msra.mxu0 0
    %337 = vmatprep.subr.bf16.mxu0 0
    %338 = vmatpush1.bf16.msra.mxu0 0
    %339 = vmatprep.subr.bf16.mxu0 0
    %340 = vmatpush1.bf16.msra.mxu0 0
    %341 = vmatprep.subr.bf16.mxu0 0
    %342 = vmatpush1.bf16.msra.mxu0 0
    %343 = vmatprep.subr.bf16.mxu0 0
    %344 = vmatpush1.bf16.msra.mxu0 0
    %345 = vmatprep.subr.bf16.mxu0 0
    %346 = vmatpush1.bf16.msra.mxu0 0
    %347 = vmatprep.mubr.bf16.mxu0 0
    %348 = vmatmul.mubr.bf16.gmra.mrb[0].mxu0 %v292
    %v349 = vpop.f32.mrb[0].mxu0
    %v350 = vadd.f32 %v276, %v349
    %v351 = vpop.f32.mrb[0].mxu0
    %v352 = vpop.f32.mrb[0].mxu0
    %v353 = vadd.f32 %v276, %v352
    %v354 = vpop.f32.mrb[0].mxu0
    %355 = vmatprep.mubr.bf16.mxu0 0
    %356 = vmatmul.mubr.bf16.gmra.mrb[0].mxu0 %v295
    %v357 = vpop.f32.mrb[0].mxu0
    %v358 = vadd.f32 %v276, %v357
    %v359 = vpop.f32.mrb[0].mxu0
    %v360 = vpop.f32.mrb[0].mxu0
    %v361 = vadd.f32 %v276, %v360
    %v362 = vpop.f32.mrb[0].mxu0
    %363 = vmatprep.mubr.bf16.mxu0 0
    %364 = vmatmul.mubr.bf16.gmra.mrb[0].mxu0 %v298
    %v365 = vpop.f32.mrb[0].mxu0
    %v366 = vadd.f32 %v276, %v365
    %v367 = vpop.f32.mrb[0].mxu0
    %v368 = vpop.f32.mrb[0].mxu0
    %v369 = vadd.f32 %v276, %v368
    %v370 = vpop.f32.mrb[0].mxu0
    %371 = vmatprep.mubr.bf16.mxu0 0
    %372 = vmatmul.mubr.bf16.gmra.mrb[0].mxu0 %v301
    %v373 = vpop.f32.mrb[0].mxu0
    %v374 = vadd.f32 %v276, %v373
    %v375 = vpop.f32.mrb[0].mxu0
    %v376 = vpop.f32.mrb[0].mxu0
    %v377 = vadd.f32 %v276, %v376
    %v378 = vpop.f32.mrb[0].mxu0
    %379 = vmatprep.mubr.bf16.mxu0 0
    %380 = vmatmul.mubr.bf16.gmra.mrb[0].mxu0 %v304
    %v381 = vpop.f32.mrb[0].mxu0
    %v382 = vadd.f32 %v276, %v381
    %v383 = vpop.f32.mrb[0].mxu0
    %v384 = vpop.f32.mrb[0].mxu0
    %v385 = vadd.f32 %v276, %v384
    %v386 = vpop.f32.mrb[0].mxu0
    %387 = vmatprep.mubr.bf16.mxu0 0
    %388 = vmatmul.mubr.bf16.gmra.mrb[0].mxu0 %v307
    %v389 = vpop.f32.mrb[0].mxu0
    %v390 = vadd.f32 %v276, %v389
    %v391 = vpop.f32.mrb[0].mxu0
    %v392 = vpop.f32.mrb[0].mxu0
    %v393 = vadd.f32 %v276, %v392
    %v394 = vpop.f32.mrb[0].mxu0
    %395 = vmatprep.mubr.bf16.mxu0 0
    %396 = vmatmul.mubr.bf16.gmra.mrb[0].mxu0 %v310
    %v397 = vpop.f32.mrb[0].mxu0
    %v398 = vadd.f32 %v276, %v397
    %v399 = vpop.f32.mrb[0].mxu0
    %v400 = vpop.f32.mrb[0].mxu0
    %v401 = vadd.f32 %v276, %v400
    %v402 = vpop.f32.mrb[0].mxu0
    %403 = vmatprep.mubr.bf16.mxu0 0
    %404 = vmatmul.mubr.bf16.gmra.mrb[0].mxu0 %v313
    %v405 = vpop.f32.mrb[0].mxu0
    %v406 = vadd.f32 %v276, %v405
    %v407 = vpop.f32.mrb[0].mxu0
    %v408 = vpop.f32.mrb[0].mxu0
    %v409 = vadd.f32 %v276, %v408
    %v410 = vpop.f32.mrb[0].mxu0
    %411 = vdwg.mxu0
    %v412 = vsel %vm290, %v350, 0.0
    %413 = vadd.xlane.f32.xlu0 %v412
    %v414 = vpop.xlane.xlu0 %413
    %v415 = vsel %vm290, %v353, 0.0
    %416 = vadd.xlane.f32.xlu0 %v415
    %v417 = vpop.xlane.xlu0 %416
    %v418 = vsel %vm290, %v358, 0.0
    %419 = vadd.xlane.f32.xlu0 %v418
    %v420 = vpop.xlane.xlu0 %419
    %v421 = vsel %vm290, %v361, 0.0
    %422 = vadd.xlane.f32.xlu0 %v421
    %v423 = vpop.xlane.xlu0 %422
    %v424 = vsel %vm290, %v366, 0.0
    %425 = vadd.xlane.f32.xlu0 %v424
    %v426 = vpop.xlane.xlu0 %425
    %v427 = vsel %vm290, %v369, 0.0
    %428 = vadd.xlane.f32.xlu0 %v427
    %v429 = vpop.xlane.xlu0 %428
    %v430 = vsel %vm290, %v374, 0.0
    %431 = vadd.xlane.f32.xlu0 %v430
    %v432 = vpop.xlane.xlu0 %431
    %v433 = vsel %vm290, %v377, 0.0
    %434 = vadd.xlane.f32.xlu0 %v433
    %v435 = vpop.xlane.xlu0 %434
    %v436 = vsel %vm290, %v382, 0.0
    %437 = vadd.xlane.f32.xlu0 %v436
    %v438 = vpop.xlane.xlu0 %437
    %v439 = vsel %vm290, %v385, 0.0
    %440 = vadd.xlane.f32.xlu0 %v439
    %v441 = vpop.xlane.xlu0 %440
    %v442 = vsel %vm290, %v390, 0.0
    %443 = vadd.xlane.f32.xlu0 %v442
    %v444 = vpop.xlane.xlu0 %443
    %v445 = vsel %vm290, %v393, 0.0
    %446 = vadd.xlane.f32.xlu0 %v445
    %v447 = vpop.xlane.xlu0 %446
    %v448 = vsel %vm290, %v398, 0.0
    %449 = vadd.xlane.f32.xlu0 %v448
    %v450 = vpop.xlane.xlu0 %449
    %v451 = vsel %vm290, %v401, 0.0
    %452 = vadd.xlane.f32.xlu0 %v451
    %v453 = vpop.xlane.xlu0 %452
    %v454 = vsel %vm290, %v406, 0.0
    %455 = vadd.xlane.f32.xlu0 %v454
    %v456 = vpop.xlane.xlu0 %455
    %v457 = vsel %vm290, %v409, 0.0
    %458 = vadd.xlane.f32.xlu0 %v457
    %v459 = vpop.xlane.xlu0 %458
    %v460 = vmul.f32 %v350, %v350
    %v461 = vmul.f32 %v353, %v353
    %v462 = vmul.f32 %v358, %v358
    %v463 = vmul.f32 %v361, %v361
    %v464 = vmul.f32 %v366, %v366
    %v465 = vmul.f32 %v369, %v369
    %v466 = vmul.f32 %v374, %v374
    %v467 = vmul.f32 %v377, %v377
    %v468 = vmul.f32 %v382, %v382
    %v469 = vmul.f32 %v385, %v385
    %v470 = vmul.f32 %v390, %v390
    %v471 = vmul.f32 %v393, %v393
    %v472 = vmul.f32 %v398, %v398
    %v473 = vmul.f32 %v401, %v401
    %v474 = vmul.f32 %v406, %v406
    %v475 = vmul.f32 %v409, %v409
    %v476 = vsel %vm290, %v460, 0.0
    %477 = vadd.xlane.f32.xlu0 %v476
    %v478 = vpop.xlane.xlu0 %477
    %v479 = vsel %vm290, %v461, 0.0
    %480 = vadd.xlane.f32.xlu0 %v479
    %v481 = vpop.xlane.xlu0 %480
    %v482 = vsel %vm290, %v462, 0.0
    %483 = vadd.xlane.f32.xlu0 %v482
    %v484 = vpop.xlane.xlu0 %483
    %v485 = vsel %vm290, %v463, 0.0
    %486 = vadd.xlane.f32.xlu0 %v485
    %v487 = vpop.xlane.xlu0 %486
    %v488 = vsel %vm290, %v464, 0.0
    %489 = vadd.xlane.f32.xlu0 %v488
    %v490 = vpop.xlane.xlu0 %489
    %v491 = vsel %vm290, %v465, 0.0
    %492 = vadd.xlane.f32.xlu0 %v491
    %v493 = vpop.xlane.xlu0 %492
    %v494 = vsel %vm290, %v466, 0.0
    %495 = vadd.xlane.f32.xlu0 %v494
    %v496 = vpop.xlane.xlu0 %495
    %v497 = vsel %vm290, %v467, 0.0
    %498 = vadd.xlane.f32.xlu0 %v497
    %v499 = vpop.xlane.xlu0 %498
    %v500 = vsel %vm290, %v468, 0.0
    %501 = vadd.xlane.f32.xlu0 %v500
    %v502 = vpop.xlane.xlu0 %501
    %v503 = vsel %vm290, %v469, 0.0
    %504 = vadd.xlane.f32.xlu0 %v503
    %v505 = vpop.xlane.xlu0 %504
    %v506 = vsel %vm290, %v470, 0.0
    %507 = vadd.xlane.f32.xlu0 %v506
    %v508 = vpop.xlane.xlu0 %507
    %v509 = vsel %vm290, %v471, 0.0
    %510 = vadd.xlane.f32.xlu0 %v509
    %v511 = vpop.xlane.xlu0 %510
    %v512 = vsel %vm290, %v472, 0.0
    %513 = vadd.xlane.f32.xlu0 %v512
    %v514 = vpop.xlane.xlu0 %513
    %v515 = vsel %vm290, %v473, 0.0
    %516 = vadd.xlane.f32.xlu0 %v515
    %v517 = vpop.xlane.xlu0 %516
    %v518 = vsel %vm290, %v474, 0.0
    %519 = vadd.xlane.f32.xlu0 %v518
    %v520 = vpop.xlane.xlu0 %519
    %v521 = vsel %vm290, %v475, 0.0
    %522 = vadd.xlane.f32.xlu0 %v521
    %v523 = vpop.xlane.xlu0 %522
    %v524 = vmul.f32 %v414, 0.03125
    %v525 = vmul.f32 %v417, 0.03125
    %v526 = vmul.f32 %v420, 0.03125
    %v527 = vmul.f32 %v423, 0.03125
    %v528 = vmul.f32 %v426, 0.03125
    %v529 = vmul.f32 %v429, 0.03125
    %v530 = vmul.f32 %v432, 0.03125
    %v531 = vmul.f32 %v435, 0.03125
    %v532 = vmul.f32 %v438, 0.03125
    %v533 = vmul.f32 %v441, 0.03125
    %v534 = vmul.f32 %v444, 0.03125
    %v535 = vmul.f32 %v447, 0.03125
    %v536 = vmul.f32 %v450, 0.03125
    %v537 = vmul.f32 %v453, 0.03125
    %v538 = vmul.f32 %v456, 0.03125
    %v539 = vmul.f32 %v459, 0.03125
    %v540 = vmul.f32 %v478, 0.03125
    %v541 = vmul.f32 %v481, 0.03125
    %v542 = vmul.f32 %v484, 0.03125
    %v543 = vmul.f32 %v487, 0.03125
    %v544 = vmul.f32 %v490, 0.03125
    %v545 = vmul.f32 %v493, 0.03125
    %v546 = vmul.f32 %v496, 0.03125
    %v547 = vmul.f32 %v499, 0.03125
    %v548 = vmul.f32 %v502, 0.03125
    %v549 = vmul.f32 %v505, 0.03125
    %v550 = vmul.f32 %v508, 0.03125
    %v551 = vmul.f32 %v511, 0.03125
    %v552 = vmul.f32 %v514, 0.03125
    %v553 = vmul.f32 %v517, 0.03125
    %v554 = vmul.f32 %v520, 0.03125
    %v555 = vmul.f32 %v523, 0.03125
    %v556 = vmul.f32 %v524, %v524
    %v557 = vmul.f32 %v525, %v525
    %v558 = vmul.f32 %v526, %v526
    %v559 = vmul.f32 %v527, %v527
    %v560 = vmul.f32 %v528, %v528
    %v561 = vmul.f32 %v529, %v529
    %v562 = vmul.f32 %v530, %v530
    %v563 = vmul.f32 %v531, %v531
    %v564 = vmul.f32 %v532, %v532
    %v565 = vmul.f32 %v533, %v533
    %v566 = vmul.f32 %v534, %v534
    %v567 = vmul.f32 %v535, %v535
    %v568 = vmul.f32 %v536, %v536
    %v569 = vmul.f32 %v537, %v537
    %v570 = vmul.f32 %v538, %v538
    %v571 = vmul.f32 %v539, %v539
    %v572 = vsub.f32 %v540, %v556
    %v573 = vsub.f32 %v541, %v557
    %v574 = vsub.f32 %v542, %v558
    %v575 = vsub.f32 %v543, %v559
    %v576 = vsub.f32 %v544, %v560
    %v577 = vsub.f32 %v545, %v561
    %v578 = vsub.f32 %v546, %v562
    %v579 = vsub.f32 %v547, %v563
    %v580 = vsub.f32 %v548, %v564
    %v581 = vsub.f32 %v549, %v565
    %v582 = vsub.f32 %v550, %v566
    %v583 = vsub.f32 %v551, %v567
    %v584 = vsub.f32 %v552, %v568
    %v585 = vsub.f32 %v553, %v569
    %v586 = vsub.f32 %v554, %v570
    %v587 = vsub.f32 %v555, %v571
    %v588 = vmax.f32 %v572, 0.0
    %v589 = vmax.f32 %v573, 0.0
    %v590 = vmax.f32 %v574, 0.0
    %v591 = vmax.f32 %v575, 0.0
    %v592 = vmax.f32 %v576, 0.0
    %v593 = vmax.f32 %v577, 0.0
    %v594 = vmax.f32 %v578, 0.0
    %v595 = vmax.f32 %v579, 0.0
    %v596 = vmax.f32 %v580, 0.0
    %v597 = vmax.f32 %v581, 0.0
    %v598 = vmax.f32 %v582, 0.0
    %v599 = vmax.f32 %v583, 0.0
    %v600 = vmax.f32 %v584, 0.0
    %v601 = vmax.f32 %v585, 0.0
    %v602 = vmax.f32 %v586, 0.0
    %v603 = vmax.f32 %v587, 0.0
    %v604 = vsub.f32 %v350, %v524
    %v605 = vsub.f32 %v353, %v525
    %v606 = vsub.f32 %v358, %v526
    %v607 = vsub.f32 %v361, %v527
    %v608 = vsub.f32 %v366, %v528
    %v609 = vsub.f32 %v369, %v529
    %v610 = vsub.f32 %v374, %v530
    %v611 = vsub.f32 %v377, %v531
    %v612 = vsub.f32 %v382, %v532
    %v613 = vsub.f32 %v385, %v533
    %v614 = vsub.f32 %v390, %v534
    %v615 = vsub.f32 %v393, %v535
    %v616 = vsub.f32 %v398, %v536
    %v617 = vsub.f32 %v401, %v537
    %v618 = vsub.f32 %v406, %v538
    %v619 = vsub.f32 %v409, %v539
    %v620 = vadd.f32 %v588, 1e-05
    %v621 = vadd.f32 %v589, 1e-05
    %v622 = vadd.f32 %v590, 1e-05
    %v623 = vadd.f32 %v591, 1e-05
    %v624 = vadd.f32 %v592, 1e-05
    %v625 = vadd.f32 %v593, 1e-05
    %v626 = vadd.f32 %v594, 1e-05
    %v627 = vadd.f32 %v595, 1e-05
    %v628 = vadd.f32 %v596, 1e-05
    %v629 = vadd.f32 %v597, 1e-05
    %v630 = vadd.f32 %v598, 1e-05
    %v631 = vadd.f32 %v599, 1e-05
    %v632 = vadd.f32 %v600, 1e-05
    %v633 = vadd.f32 %v601, 1e-05
    %v634 = vadd.f32 %v602, 1e-05
    %v635 = vadd.f32 %v603, 1e-05
    %v636 = vrsqrt.pop %v620
    %v637 = vrsqrt.pop %v621
    %v638 = vrsqrt.pop %v622
    %v639 = vrsqrt.pop %v623
    %v640 = vrsqrt.pop %v624
    %v641 = vrsqrt.pop %v625
    %v642 = vrsqrt.pop %v626
    %v643 = vrsqrt.pop %v627
    %v644 = vrsqrt.pop %v628
    %v645 = vrsqrt.pop %v629
    %v646 = vrsqrt.pop %v630
    %v647 = vrsqrt.pop %v631
    %v648 = vrsqrt.pop %v632
    %v649 = vrsqrt.pop %v633
    %v650 = vrsqrt.pop %v634
    %v651 = vrsqrt.pop %v635
    %v652 = vmul.f32 %v604, %v636
    %v653 = vmul.f32 %v605, %v637
    %v654 = vmul.f32 %v606, %v638
    %v655 = vmul.f32 %v607, %v639
    %v656 = vmul.f32 %v608, %v640
    %v657 = vmul.f32 %v609, %v641
    %v658 = vmul.f32 %v610, %v642
    %v659 = vmul.f32 %v611, %v643
    %v660 = vmul.f32 %v612, %v644
    %v661 = vmul.f32 %v613, %v645
    %v662 = vmul.f32 %v614, %v646
    %v663 = vmul.f32 %v615, %v647
    %v664 = vmul.f32 %v616, %v648
    %v665 = vmul.f32 %v617, %v649
    %v666 = vmul.f32 %v618, %v650
    %v667 = vmul.f32 %v619, %v651
    %v668 = vld [vmem:[%s5] sm:$0x1]
    %v670 = vlaneseq
    %v671 = vshrl.u32 %v670, 7
    %v672 = vsub.s32 0, %v671
    %v673 = vrot.slane %v668, %v672
    %v675 = vmul.f32 %v652, %v673
    %v676 = vmul.f32 %v653, %v673
    %v677 = vmul.f32 %v654, %v673
    %v678 = vmul.f32 %v655, %v673
    %v679 = vmul.f32 %v656, %v673
    %v680 = vmul.f32 %v657, %v673
    %v681 = vmul.f32 %v658, %v673
    %v682 = vmul.f32 %v659, %v673
    %v683 = vmul.f32 %v660, %v673
    %v684 = vmul.f32 %v661, %v673
    %v685 = vmul.f32 %v662, %v673
    %v686 = vmul.f32 %v663, %v673
    %v687 = vmul.f32 %v664, %v673
    %v688 = vmul.f32 %v665, %v673
    %v689 = vmul.f32 %v666, %v673
    %v690 = vmul.f32 %v667, %v673
    %v691 = vld [vmem:[%s6] sm:$0x1]
    %v693 = vlaneseq
    %v694 = vshrl.u32 %v693, 7
    %v695 = vsub.s32 0, %v694
    %v696 = vrot.slane %v691, %v695
    %v698 = vadd.f32 %v675, %v696
    %v699 = vadd.f32 %v676, %v696
    %v700 = vadd.f32 %v677, %v696
    %v701 = vadd.f32 %v678, %v696
    %v702 = vadd.f32 %v679, %v696
    %v703 = vadd.f32 %v680, %v696
    %v704 = vadd.f32 %v681, %v696
    %v705 = vadd.f32 %v682, %v696
    %v706 = vadd.f32 %v683, %v696
    %v707 = vadd.f32 %v684, %v696
    %v708 = vadd.f32 %v685, %v696
    %v709 = vadd.f32 %v686, %v696
    %v710 = vadd.f32 %v687, %v696
    %v711 = vadd.f32 %v688, %v696
    %v712 = vadd.f32 %v689, %v696
    %v713 = vadd.f32 %v690, %v696
    %v714 = vmul.f32 %v698, 0.5
    %v715 = vmul.f32 %v699, 0.5
    %v716 = vmul.f32 %v700, 0.5
    %v717 = vmul.f32 %v701, 0.5
    %v718 = vmul.f32 %v702, 0.5
    %v719 = vmul.f32 %v703, 0.5
    %v720 = vmul.f32 %v704, 0.5
    %v721 = vmul.f32 %v705, 0.5
    %v722 = vmul.f32 %v706, 0.5
    %v723 = vmul.f32 %v707, 0.5
    %v724 = vmul.f32 %v708, 0.5
    %v725 = vmul.f32 %v709, 0.5
    %v726 = vmul.f32 %v710, 0.5
    %v727 = vmul.f32 %v711, 0.5
    %v728 = vmul.f32 %v712, 0.5
    %v729 = vmul.f32 %v713, 0.5
    %v730 = vtanh.pop %v714
    %v731 = vtanh.pop %v715
    %v732 = vtanh.pop %v716
    %v733 = vtanh.pop %v717
    %v734 = vtanh.pop %v718
    %v735 = vtanh.pop %v719
    %v736 = vtanh.pop %v720
    %v737 = vtanh.pop %v721
    %v738 = vtanh.pop %v722
    %v739 = vtanh.pop %v723
    %v740 = vtanh.pop %v724
    %v741 = vtanh.pop %v725
    %v742 = vtanh.pop %v726
    %v743 = vtanh.pop %v727
    %v744 = vtanh.pop %v728
    %v745 = vtanh.pop %v729
    %v746 = vadd.f32 %v730, 1.0
    %v747 = vadd.f32 %v731, 1.0
    %v748 = vadd.f32 %v732, 1.0
    %v749 = vadd.f32 %v733, 1.0
    %v750 = vadd.f32 %v734, 1.0
    %v751 = vadd.f32 %v735, 1.0
    %v752 = vadd.f32 %v736, 1.0
    %v753 = vadd.f32 %v737, 1.0
    %v754 = vadd.f32 %v738, 1.0
    %v755 = vadd.f32 %v739, 1.0
    %v756 = vadd.f32 %v740, 1.0
    %v757 = vadd.f32 %v741, 1.0
    %v758 = vadd.f32 %v742, 1.0
    %v759 = vadd.f32 %v743, 1.0
    %v760 = vadd.f32 %v744, 1.0
    %v761 = vadd.f32 %v745, 1.0
    %v762 = vmul.f32 %v714, %v746
    %v763 = vmul.f32 %v715, %v747
    %v764 = vmul.f32 %v716, %v748
    %v765 = vmul.f32 %v717, %v749
    %v766 = vmul.f32 %v718, %v750
    %v767 = vmul.f32 %v719, %v751
    %v768 = vmul.f32 %v720, %v752
    %v769 = vmul.f32 %v721, %v753
    %v770 = vmul.f32 %v722, %v754
    %v771 = vmul.f32 %v723, %v755
    %v772 = vmul.f32 %v724, %v756
    %v773 = vmul.f32 %v725, %v757
    %v774 = vmul.f32 %v726, %v758
    %v775 = vmul.f32 %v727, %v759
    %v776 = vmul.f32 %v728, %v760
    %v777 = vmul.f32 %v729, %v761
    %v778 = vpack.c.bf16 %v763, %v762
    %v779 = vpack.c.bf16 %v765, %v764
    %v780 = vpack.c.bf16 %v767, %v766
    %v781 = vpack.c.bf16 %v769, %v768
    %v782 = vpack.c.bf16 %v771, %v770
    %v783 = vpack.c.bf16 %v773, %v772
    %v784 = vpack.c.bf16 %v775, %v774
    %v785 = vpack.c.bf16 %v777, %v776
    %v786 = vld [vmem:[%s7] sm:$0xf]
    %v787 = vld [vmem:[%s7 + $0x4] sm:$0xf]
    %v788 = vld [vmem:[%s7 + $0x8] sm:$0xf]
    %v789 = vld [vmem:[%s7 + $0xc] sm:$0xf]
    %v790 = vld [vmem:[%s8] sm:$0x1]
    %v792 = vlaneseq
    %v793 = vshrl.u32 %v792, 7
    %v794 = vsub.s32 0, %v793
    %v795 = vrot.slane %v790, %v794
    %v801 = vunpack.c.l.b16 %v786
    %v802 = vunpack.c.l.b16 %v787
    %v803 = vunpack.c.l.b16 %v788
    %v804 = vunpack.c.l.b16 %v789
    %v805 = vpack.c.b16 %v802, %v801
    %v806 = vpack.c.b16 %v804, %v803
    %v810 = vsel %vm290, %v778, 0
    %v813 = vsel %vm290, %v779, 0
    %v816 = vsel %vm290, %v780, 0
    %v819 = vsel %vm290, %v781, 0
    %v822 = vsel %vm290, %v782, 0
    %v825 = vsel %vm290, %v783, 0
    %v828 = vsel %vm290, %v784, 0
    %v831 = vsel %vm290, %v785, 0
    %833 = vmatprep.subr.bf16.mxu0 0
    %834 = vmatpush1.bf16.msra.mxu0 %v805
    %835 = vmatprep.subr.bf16.mxu0 0
    %836 = vmatpush1.bf16.msra.mxu0 %v806
    %837 = vmatprep.subr.bf16.mxu0 0
    %838 = vmatpush1.bf16.msra.mxu0 0
    %839 = vmatprep.subr.bf16.mxu0 0
    %840 = vmatpush1.bf16.msra.mxu0 0
    %841 = vmatprep.subr.bf16.mxu0 0
    %842 = vmatpush1.bf16.msra.mxu0 0
    %843 = vmatprep.subr.bf16.mxu0 0
    %844 = vmatpush1.bf16.msra.mxu0 0
    %845 = vmatprep.subr.bf16.mxu0 0
    %846 = vmatpush1.bf16.msra.mxu0 0
    %847 = vmatprep.subr.bf16.mxu0 0
    %848 = vmatpush1.bf16.msra.mxu0 0
    %849 = vmatprep.subr.bf16.mxu0 0
    %850 = vmatpush1.bf16.msra.mxu0 0
    %851 = vmatprep.subr.bf16.mxu0 0
    %852 = vmatpush1.bf16.msra.mxu0 0
    %853 = vmatprep.subr.bf16.mxu0 0
    %854 = vmatpush1.bf16.msra.mxu0 0
    %855 = vmatprep.subr.bf16.mxu0 0
    %856 = vmatpush1.bf16.msra.mxu0 0
    %857 = vmatprep.subr.bf16.mxu0 0
    %858 = vmatpush1.bf16.msra.mxu0 0
    %859 = vmatprep.subr.bf16.mxu0 0
    %860 = vmatpush1.bf16.msra.mxu0 0
    %861 = vmatprep.subr.bf16.mxu0 0
    %862 = vmatpush1.bf16.msra.mxu0 0
    %863 = vmatprep.subr.bf16.mxu0 0
    %864 = vmatpush1.bf16.msra.mxu0 0
    %865 = vmatprep.mubr.bf16.mxu0 0
    %866 = vmatmul.mubr.bf16.gmra.mrb[0].mxu0 %v810
    %v867 = vpop.f32.mrb[0].mxu0
    %v868 = vadd.f32 %v795, %v867
    %v869 = vpop.f32.mrb[0].mxu0
    %v870 = vpop.f32.mrb[0].mxu0
    %v871 = vadd.f32 %v795, %v870
    %v872 = vpop.f32.mrb[0].mxu0
    %873 = vmatprep.mubr.bf16.mxu0 0
    %874 = vmatmul.mubr.bf16.gmra.mrb[0].mxu0 %v813
    %v875 = vpop.f32.mrb[0].mxu0
    %v876 = vadd.f32 %v795, %v875
    %v877 = vpop.f32.mrb[0].mxu0
    %v878 = vpop.f32.mrb[0].mxu0
    %v879 = vadd.f32 %v795, %v878
    %v880 = vpop.f32.mrb[0].mxu0
    %881 = vmatprep.mubr.bf16.mxu0 0
    %882 = vmatmul.mubr.bf16.gmra.mrb[0].mxu0 %v816
    %v883 = vpop.f32.mrb[0].mxu0
    %v884 = vadd.f32 %v795, %v883
    %v885 = vpop.f32.mrb[0].mxu0
    %v886 = vpop.f32.mrb[0].mxu0
    %v887 = vadd.f32 %v795, %v886
    %v888 = vpop.f32.mrb[0].mxu0
    %889 = vmatprep.mubr.bf16.mxu0 0
    %890 = vmatmul.mubr.bf16.gmra.mrb[0].mxu0 %v819
    %v891 = vpop.f32.mrb[0].mxu0
    %v892 = vadd.f32 %v795, %v891
    %v893 = vpop.f32.mrb[0].mxu0
    %v894 = vpop.f32.mrb[0].mxu0
    %v895 = vadd.f32 %v795, %v894
    %v896 = vpop.f32.mrb[0].mxu0
    %897 = vmatprep.mubr.bf16.mxu0 0
    %898 = vmatmul.mubr.bf16.gmra.mrb[0].mxu0 %v822
    %v899 = vpop.f32.mrb[0].mxu0
    %v900 = vadd.f32 %v795, %v899
    %v901 = vpop.f32.mrb[0].mxu0
    %v902 = vpop.f32.mrb[0].mxu0
    %v903 = vadd.f32 %v795, %v902
    %v904 = vpop.f32.mrb[0].mxu0
    %905 = vmatprep.mubr.bf16.mxu0 0
    %906 = vmatmul.mubr.bf16.gmra.mrb[0].mxu0 %v825
    %v907 = vpop.f32.mrb[0].mxu0
    %v908 = vadd.f32 %v795, %v907
    %v909 = vpop.f32.mrb[0].mxu0
    %v910 = vpop.f32.mrb[0].mxu0
    %v911 = vadd.f32 %v795, %v910
    %v912 = vpop.f32.mrb[0].mxu0
    %913 = vmatprep.mubr.bf16.mxu0 0
    %914 = vmatmul.mubr.bf16.gmra.mrb[0].mxu0 %v828
    %v915 = vpop.f32.mrb[0].mxu0
    %v916 = vadd.f32 %v795, %v915
    %v917 = vpop.f32.mrb[0].mxu0
    %v918 = vpop.f32.mrb[0].mxu0
    %v919 = vadd.f32 %v795, %v918
    %v920 = vpop.f32.mrb[0].mxu0
    %921 = vmatprep.mubr.bf16.mxu0 0
    %922 = vmatmul.mubr.bf16.gmra.mrb[0].mxu0 %v831
    %v923 = vpop.f32.mrb[0].mxu0
    %v924 = vadd.f32 %v795, %v923
    %v925 = vpop.f32.mrb[0].mxu0
    %v926 = vpop.f32.mrb[0].mxu0
    %v927 = vadd.f32 %v795, %v926
    %v928 = vpop.f32.mrb[0].mxu0
    %929 = vdwg.mxu0
    %930 = vst [vmem:[#allocation2] sm:$0xff] %v868
    %931 = vst [vmem:[#allocation2 + $0x8] sm:$0xff] %v871
    %932 = vst [vmem:[#allocation2 + $0x10] sm:$0xff] %v876
    %933 = vst [vmem:[#allocation2 + $0x18] sm:$0xff] %v879
    %934 = vst [vmem:[#allocation2 + $0x20] sm:$0xff] %v884
    %935 = vst [vmem:[#allocation2 + $0x28] sm:$0xff] %v887
    %936 = vst [vmem:[#allocation2 + $0x30] sm:$0xff] %v892
    %937 = vst [vmem:[#allocation2 + $0x38] sm:$0xff] %v895
    %938 = vst [vmem:[#allocation2 + $0x40] sm:$0xff] %v900
    %939 = vst [vmem:[#allocation2 + $0x48] sm:$0xff] %v903
    %940 = vst [vmem:[#allocation2 + $0x50] sm:$0xff] %v908
    %941 = vst [vmem:[#allocation2 + $0x58] sm:$0xff] %v911
    %942 = vst [vmem:[#allocation2 + $0x60] sm:$0xff] %v916
    %943 = vst [vmem:[#allocation2 + $0x68] sm:$0xff] %v919
    %944 = vst [vmem:[#allocation2 + $0x70] sm:$0xff] %v924
    %945 = vst [vmem:[#allocation2 + $0x78] sm:$0xff] %v927
    // Predicated region
    $region38: #{tpu_custom_call.1} parent=1 // pred_check
      _
    $region39: #{tpu_custom_call.1} parent=1 // pred_check_branch
      %947 = sbr.rel (0) target = $region41
    $region40: #{tpu_custom_call.1} parent=1 // pred_region
      %s949 = ssub.s32 2048, 1024
      %950 = vsyncadd [#allocation3], %s949
      %s951 = sshll.u32 [#allocation2], 4
      %s952 = int_to_ptr.vmem [resolvable:$true] %s951
      %957 = dma.vmem_to_hbm [thread:$0]  %s952, 1024, %s9, [#allocation3], 128, 128, 8
    $region41: #{tpu_custom_call.1} parent=1 // pred_fallthru
      _
    // Predicated region
    $region42: #{tpu_custom_call.1} parent=1 // pred_check
      _
    $region43: #{tpu_custom_call.1} parent=1 // pred_check_branch
      %959 = sbr.rel (0) target = $region45
    $region44: #{tpu_custom_call.1} parent=1 // pred_region
      %960 = dma.done [#allocation3], 2048
    $region45: #{tpu_custom_call.1} parent=1 // pred_fallthru
      _
    %961 = vsyncpa [#allocation3], 1

// kernel: tpu_custom_call.1
$region0: #{tpu_custom_call.1}
  #allocation0 [shape = 'u32[]', space=smem, size = 0x4, offset = 0x4, fixed_abs, tag = 'smem constant byte address 0x4 - core index']
  #allocation1 [shape = 'u32[144,128]{1,0:T(1,128)}', space=vmem, size = 0x12000, scoped, tag = 'internal scratch']
  %s0 = inlined_call_operand.vmem [shape: f32[64,16], index: 0, kind: input, shape index: {}]
  %s1 = inlined_call_operand.vmem [shape: bf16[16,32], index: 1, kind: input, shape index: {}]
  %s2 = inlined_call_operand.vmem [shape: f32[1,32], index: 2, kind: input, shape index: {}]
  %s3 = inlined_call_operand.vmem [shape: bf16[32,32], index: 3, kind: input, shape index: {}]
  %s4 = inlined_call_operand.vmem [shape: f32[1,32], index: 4, kind: input, shape index: {}]
  %s5 = inlined_call_operand.vmem [shape: f32[1,32], index: 5, kind: input, shape index: {}]
  %s6 = inlined_call_operand.vmem [shape: f32[1,32], index: 6, kind: input, shape index: {}]
  %s7 = inlined_call_operand.vmem [shape: bf16[32,128], index: 7, kind: input, shape index: {}]
  %s8 = inlined_call_operand.vmem [shape: f32[1,128], index: 8, kind: input, shape index: {}]
  %s9 = inlined_call_operand.hbm [shape: f32[64,128], index: 9, kind: output, shape index: {}]
  %s10 = sld [smem:[#allocation0]]
  $region46: #{tpu_custom_call.1} parent=0
    _
  %s12 = ssub.s32 1, %s10
  %s13 = scalar_select 0, %s12, %s10
  $region1: #{tpu_custom_call.1} parent=0
    #allocation2 [shape = 'u8[65536]{0}', space=vmem, size = 0x10000, scoped, tag = 'output window, operand 0, single buffered']
    #allocation3 [shape = 's32[1]{0}', space=sflag, size = 0x4, scoped, tag = 'scoped memory for tpu_custom_call.1']
    %14 = vsyncpa [#allocation3], 0
    // Predicated region
    $region2: #{tpu_custom_call.1} parent=1 // pred_check
      _
    $region3: #{tpu_custom_call.1} parent=1 // pred_check_branch
      %16 = sbr.rel (0) target = $region5
    $region4: #{tpu_custom_call.1} parent=1 // pred_region
      _
    $region5: #{tpu_custom_call.1} parent=1 // pred_fallthru
      _
    // Predicated region
    $region6: #{tpu_custom_call.1} parent=1 // pred_check
      _
    $region7: #{tpu_custom_call.1} parent=1 // pred_check_branch
      %18 = sbr.rel (0) target = $region9
    $region8: #{tpu_custom_call.1} parent=1 // pred_region
      _
    $region9: #{tpu_custom_call.1} parent=1 // pred_fallthru
      _
    // Predicated region
    $region10: #{tpu_custom_call.1} parent=1 // pred_check
      _
    $region11: #{tpu_custom_call.1} parent=1 // pred_check_branch
      %20 = sbr.rel (0) target = $region13
    $region12: #{tpu_custom_call.1} parent=1 // pred_region
      _
    $region13: #{tpu_custom_call.1} parent=1 // pred_fallthru
      _
    // Predicated region
    $region14: #{tpu_custom_call.1} parent=1 // pred_check
      _
    $region15: #{tpu_custom_call.1} parent=1 // pred_check_branch
      %22 = sbr.rel (0) target = $region17
    $region16: #{tpu_custom_call.1} parent=1 // pred_region
      _
    $region17: #{tpu_custom_call.1} parent=1 // pred_fallthru
      _
    // Predicated region
    $region18: #{tpu_custom_call.1} parent=1 // pred_check
      _
    $region19: #{tpu_custom_call.1} parent=1 // pred_check_branch
      %24 = sbr.rel (0) target = $region21
    $region20: #{tpu_custom_call.1} parent=1 // pred_region
      _
    $region21: #{tpu_custom_call.1} parent=1 // pred_fallthru
      _
    // Predicated region
    $region22: #{tpu_custom_call.1} parent=1 // pred_check
      _
    $region23: #{tpu_custom_call.1} parent=1 // pred_check_branch
      %26 = sbr.rel (0) target = $region25
    $region24: #{tpu_custom_call.1} parent=1 // pred_region
      _
    $region25: #{tpu_custom_call.1} parent=1 // pred_fallthru
      _
    // Predicated region
    $region26: #{tpu_custom_call.1} parent=1 // pred_check
      _
    $region27: #{tpu_custom_call.1} parent=1 // pred_check_branch
      %28 = sbr.rel (0) target = $region29
    $region28: #{tpu_custom_call.1} parent=1 // pred_region
      _
    $region29: #{tpu_custom_call.1} parent=1 // pred_fallthru
      _
    // Predicated region
    $region30: #{tpu_custom_call.1} parent=1 // pred_check
      _
    $region31: #{tpu_custom_call.1} parent=1 // pred_check_branch
      %30 = sbr.rel (0) target = $region33
    $region32: #{tpu_custom_call.1} parent=1 // pred_region
      _
    $region33: #{tpu_custom_call.1} parent=1 // pred_fallthru
      _
    // Predicated region
    $region34: #{tpu_custom_call.1} parent=1 // pred_check
      _
    $region35: #{tpu_custom_call.1} parent=1 // pred_check_branch
      %32 = sbr.rel (0) target = $region37
    $region36: #{tpu_custom_call.1} parent=1 // pred_region
      _
    $region37: #{tpu_custom_call.1} parent=1 // pred_fallthru
      _
    %v34 = vld [vmem:[%s0] sm:$0xff]
    %v35 = vld [vmem:[%s0 + $0x8] sm:$0xff]
    %v36 = vld [vmem:[%s0 + $0x10] sm:$0xff]
    %v37 = vld [vmem:[%s0 + $0x18] sm:$0xff]
    %v38 = vld [vmem:[%s0 + $0x20] sm:$0xff]
    %v39 = vld [vmem:[%s0 + $0x28] sm:$0xff]
    %v40 = vld [vmem:[%s0 + $0x30] sm:$0xff]
    %v41 = vld [vmem:[%s0 + $0x38] sm:$0xff]
    %v42 = vld [vmem:[%s0 + $0x40] sm:$0xff]
    %v43 = vld [vmem:[%s0 + $0x48] sm:$0xff]
    %v44 = vld [vmem:[%s0 + $0x50] sm:$0xff]
    %v45 = vld [vmem:[%s0 + $0x58] sm:$0xff]
    %v46 = vld [vmem:[%s0 + $0x60] sm:$0xff]
    %v47 = vld [vmem:[%s0 + $0x68] sm:$0xff]
    %v48 = vld [vmem:[%s0 + $0x70] sm:$0xff]
    %v49 = vld [vmem:[%s0 + $0x78] sm:$0xff]
    %v50 = vpack.c.bf16 %v35, %v34
    %v51 = vpack.c.bf16 %v37, %v36
    %v52 = vpack.c.bf16 %v39, %v38
    %v53 = vpack.c.bf16 %v41, %v40
    %v54 = vpack.c.bf16 %v43, %v42
    %v55 = vpack.c.bf16 %v45, %v44
    %v56 = vpack.c.bf16 %v47, %v46
    %v57 = vpack.c.bf16 %v49, %v48
    %v58 = vld [vmem:[%s1] sm:$0xf]
    %v59 = vld [vmem:[%s1 + $0x4] sm:$0xf]
    %v60 = vld [vmem:[%s2] sm:$0x1]
    %v62 = vlaneseq
    %v63 = vshrl.u32 %v62, 7
    %v64 = vsub.s32 0, %v63
    %v65 = vrot.slane %v60, %v64
    %v69 = vunpack.c.l.b16 %v58
    %v70 = vunpack.c.l.b16 %v59
    %v71 = vpack.c.b16 %v70, %v69
    %vm73 = vcmask 130048
    %v75 = vsel %vm73, %v50, 0
    %v78 = vsel %vm73, %v51, 0
    %v81 = vsel %vm73, %v52, 0
    %v84 = vsel %vm73, %v53, 0
    %v87 = vsel %vm73, %v54, 0
    %v90 = vsel %vm73, %v55, 0
    %v93 = vsel %vm73, %v56, 0
    %v96 = vsel %vm73, %v57, 0
    %98 = vmatprep.subr.bf16.mxu0 0
    %99 = vmatpush1.bf16.msra.mxu0 %v71
    %100 = vmatprep.subr.bf16.mxu0 0
    %101 = vmatpush1.bf16.msra.mxu0 0
    %102 = vmatprep.subr.bf16.mxu0 0
    %103 = vmatpush1.bf16.msra.mxu0 0
    %104 = vmatprep.subr.bf16.mxu0 0
    %105 = vmatpush1.bf16.msra.mxu0 0
    %106 = vmatprep.subr.bf16.mxu0 0
    %107 = vmatpush1.bf16.msra.mxu0 0
    %108 = vmatprep.subr.bf16.mxu0 0
    %109 = vmatpush1.bf16.msra.mxu0 0
    %110 = vmatprep.subr.bf16.mxu0 0
    %111 = vmatpush1.bf16.msra.mxu0 0
    %112 = vmatprep.subr.bf16.mxu0 0
    %113 = vmatpush1.bf16.msra.mxu0 0
    %114 = vmatprep.subr.bf16.mxu0 0
    %115 = vmatpush1.bf16.msra.mxu0 0
    %116 = vmatprep.subr.bf16.mxu0 0
    %117 = vmatpush1.bf16.msra.mxu0 0
    %118 = vmatprep.subr.bf16.mxu0 0
    %119 = vmatpush1.bf16.msra.mxu0 0
    %120 = vmatprep.subr.bf16.mxu0 0
    %121 = vmatpush1.bf16.msra.mxu0 0
    %122 = vmatprep.subr.bf16.mxu0 0
    %123 = vmatpush1.bf16.msra.mxu0 0
    %124 = vmatprep.subr.bf16.mxu0 0
    %125 = vmatpush1.bf16.msra.mxu0 0
    %126 = vmatprep.subr.bf16.mxu0 0
    %127 = vmatpush1.bf16.msra.mxu0 0
    %128 = vmatprep.subr.bf16.mxu0 0
    %129 = vmatpush1.bf16.msra.mxu0 0
    %130 = vmatprep.mubr.bf16.mxu0 0
    %131 = vmatmul.mubr.bf16.gmra.mrb[0].mxu0 %v75
    %v132 = vpop.f32.mrb[0].mxu0
    %v133 = vadd.f32 %v65, %v132
    %v134 = vpop.f32.mrb[0].mxu0
    %v135 = vpop.f32.mrb[0].mxu0
    %v136 = vadd.f32 %v65, %v135
    %v137 = vpop.f32.mrb[0].mxu0
    %138 = vmatprep.mubr.bf16.mxu0 0
    %139 = vmatmul.mubr.bf16.gmra.mrb[0].mxu0 %v78
    %v140 = vpop.f32.mrb[0].mxu0
    %v141 = vadd.f32 %v65, %v140
    %v142 = vpop.f32.mrb[0].mxu0
    %v143 = vpop.f32.mrb[0].mxu0
    %v144 = vadd.f32 %v65, %v143
    %v145 = vpop.f32.mrb[0].mxu0
    %146 = vmatprep.mubr.bf16.mxu0 0
    %147 = vmatmul.mubr.bf16.gmra.mrb[0].mxu0 %v81
    %v148 = vpop.f32.mrb[0].mxu0
    %v149 = vadd.f32 %v65, %v148
    %v150 = vpop.f32.mrb[0].mxu0
    %v151 = vpop.f32.mrb[0].mxu0
    %v152 = vadd.f32 %v65, %v151
    %v153 = vpop.f32.mrb[0].mxu0
    %154 = vmatprep.mubr.bf16.mxu0 0
    %155 = vmatmul.mubr.bf16.gmra.mrb[0].mxu0 %v84
    %v156 = vpop.f32.mrb[0].mxu0
    %v157 = vadd.f32 %v65, %v156
    %v158 = vpop.f32.mrb[0].mxu0
    %v159 = vpop.f32.mrb[0].mxu0
    %v160 = vadd.f32 %v65, %v159
    %v161 = vpop.f32.mrb[0].mxu0
    %162 = vmatprep.mubr.bf16.mxu0 0
    %163 = vmatmul.mubr.bf16.gmra.mrb[0].mxu0 %v87
    %v164 = vpop.f32.mrb[0].mxu0
    %v165 = vadd.f32 %v65, %v164
    %v166 = vpop.f32.mrb[0].mxu0
    %v167 = vpop.f32.mrb[0].mxu0
    %v168 = vadd.f32 %v65, %v167
    %v169 = vpop.f32.mrb[0].mxu0
    %170 = vmatprep.mubr.bf16.mxu0 0
    %171 = vmatmul.mubr.bf16.gmra.mrb[0].mxu0 %v90
    %v172 = vpop.f32.mrb[0].mxu0
    %v173 = vadd.f32 %v65, %v172
    %v174 = vpop.f32.mrb[0].mxu0
    %v175 = vpop.f32.mrb[0].mxu0
    %v176 = vadd.f32 %v65, %v175
    %v177 = vpop.f32.mrb[0].mxu0
    %178 = vmatprep.mubr.bf16.mxu0 0
    %179 = vmatmul.mubr.bf16.gmra.mrb[0].mxu0 %v93
    %v180 = vpop.f32.mrb[0].mxu0
    %v181 = vadd.f32 %v65, %v180
    %v182 = vpop.f32.mrb[0].mxu0
    %v183 = vpop.f32.mrb[0].mxu0
    %v184 = vadd.f32 %v65, %v183
    %v185 = vpop.f32.mrb[0].mxu0
    %186 = vmatprep.mubr.bf16.mxu0 0
    %187 = vmatmul.mubr.bf16.gmra.mrb[0].mxu0 %v96
    %v188 = vpop.f32.mrb[0].mxu0
    %v189 = vadd.f32 %v65, %v188
    %v190 = vpop.f32.mrb[0].mxu0
    %v191 = vpop.f32.mrb[0].mxu0
    %v192 = vadd.f32 %v65, %v191
    %v193 = vpop.f32.mrb[0].mxu0
    %194 = vdwg.mxu0
    %v195 = vmul.f32 %v133, 0.5
    %v196 = vmul.f32 %v136, 0.5
    %v197 = vmul.f32 %v141, 0.5
    %v198 = vmul.f32 %v144, 0.5
    %v199 = vmul.f32 %v149, 0.5
    %v200 = vmul.f32 %v152, 0.5
    %v201 = vmul.f32 %v157, 0.5
    %v202 = vmul.f32 %v160, 0.5
    %v203 = vmul.f32 %v165, 0.5
    %v204 = vmul.f32 %v168, 0.5
    %v205 = vmul.f32 %v173, 0.5
    %v206 = vmul.f32 %v176, 0.5
    %v207 = vmul.f32 %v181, 0.5
    %v208 = vmul.f32 %v184, 0.5
    %v209 = vmul.f32 %v189, 0.5
    %v210 = vmul.f32 %v192, 0.5
    %v211 = vtanh.pop %v195
    %v212 = vtanh.pop %v196
    %v213 = vtanh.pop %v197
    %v214 = vtanh.pop %v198
    %v215 = vtanh.pop %v199
    %v216 = vtanh.pop %v200
    %v217 = vtanh.pop %v201
    %v218 = vtanh.pop %v202
    %v219 = vtanh.pop %v203
    %v220 = vtanh.pop %v204
    %v221 = vtanh.pop %v205
    %v222 = vtanh.pop %v206
    %v223 = vtanh.pop %v207
    %v224 = vtanh.pop %v208
    %v225 = vtanh.pop %v209
    %v226 = vtanh.pop %v210
    %v227 = vadd.f32 %v211, 1.0
    %v228 = vadd.f32 %v212, 1.0
    %v229 = vadd.f32 %v213, 1.0
    %v230 = vadd.f32 %v214, 1.0
    %v231 = vadd.f32 %v215, 1.0
    %v232 = vadd.f32 %v216, 1.0
    %v233 = vadd.f32 %v217, 1.0
    %v234 = vadd.f32 %v218, 1.0
    %v235 = vadd.f32 %v219, 1.0
    %v236 = vadd.f32 %v220, 1.0
    %v237 = vadd.f32 %v221, 1.0
    %v238 = vadd.f32 %v222, 1.0
    %v239 = vadd.f32 %v223, 1.0
    %v240 = vadd.f32 %v224, 1.0
    %v241 = vadd.f32 %v225, 1.0
    %v242 = vadd.f32 %v226, 1.0
    %v243 = vmul.f32 %v195, %v227
    %v244 = vmul.f32 %v196, %v228
    %v245 = vmul.f32 %v197, %v229
    %v246 = vmul.f32 %v198, %v230
    %v247 = vmul.f32 %v199, %v231
    %v248 = vmul.f32 %v200, %v232
    %v249 = vmul.f32 %v201, %v233
    %v250 = vmul.f32 %v202, %v234
    %v251 = vmul.f32 %v203, %v235
    %v252 = vmul.f32 %v204, %v236
    %v253 = vmul.f32 %v205, %v237
    %v254 = vmul.f32 %v206, %v238
    %v255 = vmul.f32 %v207, %v239
    %v256 = vmul.f32 %v208, %v240
    %v257 = vmul.f32 %v209, %v241
    %v258 = vmul.f32 %v210, %v242
    %v259 = vpack.c.bf16 %v244, %v243
    %v260 = vpack.c.bf16 %v246, %v245
    %v261 = vpack.c.bf16 %v248, %v247
    %v262 = vpack.c.bf16 %v250, %v249
    %v263 = vpack.c.bf16 %v252, %v251
    %v264 = vpack.c.bf16 %v254, %v253
    %v265 = vpack.c.bf16 %v256, %v255
    %v266 = vpack.c.bf16 %v258, %v257
    %v267 = vld [vmem:[%s3] sm:$0xf]
    %v268 = vld [vmem:[%s3 + $0x4] sm:$0xf]
    %v269 = vld [vmem:[%s3 + $0x8] sm:$0xf]
    %v270 = vld [vmem:[%s3 + $0xc] sm:$0xf]
    %v271 = vld [vmem:[%s4] sm:$0x1]
    %v273 = vlaneseq
    %v274 = vshrl.u32 %v273, 7
    %v275 = vsub.s32 0, %v274
    %v276 = vrot.slane %v271, %v275
    %v282 = vunpack.c.l.b16 %v267
    %v283 = vunpack.c.l.b16 %v268
    %v284 = vunpack.c.l.b16 %v269
    %v285 = vunpack.c.l.b16 %v270
    %v286 = vpack.c.b16 %v283, %v282
    %v287 = vpack.c.b16 %v285, %v284
    %vm290 = vcmask 261120
    %v292 = vsel %vm290, %v259, 0
    %v295 = vsel %vm290, %v260, 0
    %v298 = vsel %vm290, %v261, 0
    %v301 = vsel %vm290, %v262, 0
    %v304 = vsel %vm290, %v263, 0
    %v307 = vsel %vm290, %v264, 0
    %v310 = vsel %vm290, %v265, 0
    %v313 = vsel %vm290, %v266, 0
    %315 = vmatprep.subr.bf16.mxu0 0
    %316 = vmatpush1.bf16.msra.mxu0 %v286
    %317 = vmatprep.subr.bf16.mxu0 0
    %318 = vmatpush1.bf16.msra.mxu0 %v287
    %319 = vmatprep.subr.bf16.mxu0 0
    %320 = vmatpush1.bf16.msra.mxu0 0
    %321 = vmatprep.subr.bf16.mxu0 0
    %322 = vmatpush1.bf16.msra.mxu0 0
    %323 = vmatprep.subr.bf16.mxu0 0
    %324 = vmatpush1.bf16.msra.mxu0 0
    %325 = vmatprep.subr.bf16.mxu0 0
    %326 = vmatpush1.bf16.msra.mxu0 0
    %327 = vmatprep.subr.bf16.mxu0 0
    %328 = vmatpush1.bf16.msra.mxu0 0
    %329 = vmatprep.subr.bf16.mxu0 0
    %330 = vmatpush1.bf16.msra.mxu0 0
    %331 = vmatprep.subr.bf16.mxu0 0
    %332 = vmatpush1.bf16.msra.mxu0 0
    %333 = vmatprep.subr.bf16.mxu0 0
    %334 = vmatpush1.bf16.msra.mxu0 0
    %335 = vmatprep.subr.bf16.mxu0 0
    %336 = vmatpush1.bf16.msra.mxu0 0
    %337 = vmatprep.subr.bf16.mxu0 0
    %338 = vmatpush1.bf16.msra.mxu0 0
    %339 = vmatprep.subr.bf16.mxu0 0
    %340 = vmatpush1.bf16.msra.mxu0 0
    %341 = vmatprep.subr.bf16.mxu0 0
    %342 = vmatpush1.bf16.msra.mxu0 0
    %343 = vmatprep.subr.bf16.mxu0 0
    %344 = vmatpush1.bf16.msra.mxu0 0
    %345 = vmatprep.subr.bf16.mxu0 0
    %346 = vmatpush1.bf16.msra.mxu0 0
    %347 = vmatprep.mubr.bf16.mxu0 0
    %348 = vmatmul.mubr.bf16.gmra.mrb[0].mxu0 %v292
    %v349 = vpop.f32.mrb[0].mxu0
    %v350 = vadd.f32 %v276, %v349
    %v351 = vpop.f32.mrb[0].mxu0
    %v352 = vpop.f32.mrb[0].mxu0
    %v353 = vadd.f32 %v276, %v352
    %v354 = vpop.f32.mrb[0].mxu0
    %355 = vmatprep.mubr.bf16.mxu0 0
    %356 = vmatmul.mubr.bf16.gmra.mrb[0].mxu0 %v295
    %v357 = vpop.f32.mrb[0].mxu0
    %v358 = vadd.f32 %v276, %v357
    %v359 = vpop.f32.mrb[0].mxu0
    %v360 = vpop.f32.mrb[0].mxu0
    %v361 = vadd.f32 %v276, %v360
    %v362 = vpop.f32.mrb[0].mxu0
    %363 = vmatprep.mubr.bf16.mxu0 0
    %364 = vmatmul.mubr.bf16.gmra.mrb[0].mxu0 %v298
    %v365 = vpop.f32.mrb[0].mxu0
    %v366 = vadd.f32 %v276, %v365
    %v367 = vpop.f32.mrb[0].mxu0
    %v368 = vpop.f32.mrb[0].mxu0
    %v369 = vadd.f32 %v276, %v368
    %v370 = vpop.f32.mrb[0].mxu0
    %371 = vmatprep.mubr.bf16.mxu0 0
    %372 = vmatmul.mubr.bf16.gmra.mrb[0].mxu0 %v301
    %v373 = vpop.f32.mrb[0].mxu0
    %v374 = vadd.f32 %v276, %v373
    %v375 = vpop.f32.mrb[0].mxu0
    %v376 = vpop.f32.mrb[0].mxu0
    %v377 = vadd.f32 %v276, %v376
    %v378 = vpop.f32.mrb[0].mxu0
    %379 = vmatprep.mubr.bf16.mxu0 0
    %380 = vmatmul.mubr.bf16.gmra.mrb[0].mxu0 %v304
    %v381 = vpop.f32.mrb[0].mxu0
    %v382 = vadd.f32 %v276, %v381
    %v383 = vpop.f32.mrb[0].mxu0
    %v384 = vpop.f32.mrb[0].mxu0
    %v385 = vadd.f32 %v276, %v384
    %v386 = vpop.f32.mrb[0].mxu0
    %387 = vmatprep.mubr.bf16.mxu0 0
    %388 = vmatmul.mubr.bf16.gmra.mrb[0].mxu0 %v307
    %v389 = vpop.f32.mrb[0].mxu0
    %v390 = vadd.f32 %v276, %v389
    %v391 = vpop.f32.mrb[0].mxu0
    %v392 = vpop.f32.mrb[0].mxu0
    %v393 = vadd.f32 %v276, %v392
    %v394 = vpop.f32.mrb[0].mxu0
    %395 = vmatprep.mubr.bf16.mxu0 0
    %396 = vmatmul.mubr.bf16.gmra.mrb[0].mxu0 %v310
    %v397 = vpop.f32.mrb[0].mxu0
    %v398 = vadd.f32 %v276, %v397
    %v399 = vpop.f32.mrb[0].mxu0
    %v400 = vpop.f32.mrb[0].mxu0
    %v401 = vadd.f32 %v276, %v400
    %v402 = vpop.f32.mrb[0].mxu0
    %403 = vmatprep.mubr.bf16.mxu0 0
    %404 = vmatmul.mubr.bf16.gmra.mrb[0].mxu0 %v313
    %v405 = vpop.f32.mrb[0].mxu0
    %v406 = vadd.f32 %v276, %v405
    %v407 = vpop.f32.mrb[0].mxu0
    %v408 = vpop.f32.mrb[0].mxu0
    %v409 = vadd.f32 %v276, %v408
    %v410 = vpop.f32.mrb[0].mxu0
    %411 = vdwg.mxu0
    %v412 = vsel %vm290, %v350, 0.0
    %413 = vadd.xlane.f32.xlu0 %v412
    %v414 = vpop.xlane.xlu0 %413
    %v415 = vsel %vm290, %v353, 0.0
    %416 = vadd.xlane.f32.xlu0 %v415
    %v417 = vpop.xlane.xlu0 %416
    %v418 = vsel %vm290, %v358, 0.0
    %419 = vadd.xlane.f32.xlu0 %v418
    %v420 = vpop.xlane.xlu0 %419
    %v421 = vsel %vm290, %v361, 0.0
    %422 = vadd.xlane.f32.xlu0 %v421
    %v423 = vpop.xlane.xlu0 %422
    %v424 = vsel %vm290, %v366, 0.0
    %425 = vadd.xlane.f32.xlu0 %v424
    %v426 = vpop.xlane.xlu0 %425
    %v427 = vsel %vm290, %v369, 0.0
    %428 = vadd.xlane.f32.xlu0 %v427
    %v429 = vpop.xlane.xlu0 %428
    %v430 = vsel %vm290, %v374, 0.0
    %431 = vadd.xlane.f32.xlu0 %v430
    %v432 = vpop.xlane.xlu0 %431
    %v433 = vsel %vm290, %v377, 0.0
    %434 = vadd.xlane.f32.xlu0 %v433
    %v435 = vpop.xlane.xlu0 %434
    %v436 = vsel %vm290, %v382, 0.0
    %437 = vadd.xlane.f32.xlu0 %v436
    %v438 = vpop.xlane.xlu0 %437
    %v439 = vsel %vm290, %v385, 0.0
    %440 = vadd.xlane.f32.xlu0 %v439
    %v441 = vpop.xlane.xlu0 %440
    %v442 = vsel %vm290, %v390, 0.0
    %443 = vadd.xlane.f32.xlu0 %v442
    %v444 = vpop.xlane.xlu0 %443
    %v445 = vsel %vm290, %v393, 0.0
    %446 = vadd.xlane.f32.xlu0 %v445
    %v447 = vpop.xlane.xlu0 %446
    %v448 = vsel %vm290, %v398, 0.0
    %449 = vadd.xlane.f32.xlu0 %v448
    %v450 = vpop.xlane.xlu0 %449
    %v451 = vsel %vm290, %v401, 0.0
    %452 = vadd.xlane.f32.xlu0 %v451
    %v453 = vpop.xlane.xlu0 %452
    %v454 = vsel %vm290, %v406, 0.0
    %455 = vadd.xlane.f32.xlu0 %v454
    %v456 = vpop.xlane.xlu0 %455
    %v457 = vsel %vm290, %v409, 0.0
    %458 = vadd.xlane.f32.xlu0 %v457
    %v459 = vpop.xlane.xlu0 %458
    %v460 = vmul.f32 %v350, %v350
    %v461 = vmul.f32 %v353, %v353
    %v462 = vmul.f32 %v358, %v358
    %v463 = vmul.f32 %v361, %v361
    %v464 = vmul.f32 %v366, %v366
    %v465 = vmul.f32 %v369, %v369
    %v466 = vmul.f32 %v374, %v374
    %v467 = vmul.f32 %v377, %v377
    %v468 = vmul.f32 %v382, %v382
    %v469 = vmul.f32 %v385, %v385
    %v470 = vmul.f32 %v390, %v390
    %v471 = vmul.f32 %v393, %v393
    %v472 = vmul.f32 %v398, %v398
    %v473 = vmul.f32 %v401, %v401
    %v474 = vmul.f32 %v406, %v406
    %v475 = vmul.f32 %v409, %v409
    %v476 = vsel %vm290, %v460, 0.0
    %477 = vadd.xlane.f32.xlu0 %v476
    %v478 = vpop.xlane.xlu0 %477
    %v479 = vsel %vm290, %v461, 0.0
    %480 = vadd.xlane.f32.xlu0 %v479
    %v481 = vpop.xlane.xlu0 %480
    %v482 = vsel %vm290, %v462, 0.0
    %483 = vadd.xlane.f32.xlu0 %v482
    %v484 = vpop.xlane.xlu0 %483
    %v485 = vsel %vm290, %v463, 0.0
    %486 = vadd.xlane.f32.xlu0 %v485
    %v487 = vpop.xlane.xlu0 %486
    %v488 = vsel %vm290, %v464, 0.0
    %489 = vadd.xlane.f32.xlu0 %v488
    %v490 = vpop.xlane.xlu0 %489
    %v491 = vsel %vm290, %v465, 0.0
    %492 = vadd.xlane.f32.xlu0 %v491
    %v493 = vpop.xlane.xlu0 %492
    %v494 = vsel %vm290, %v466, 0.0
    %495 = vadd.xlane.f32.xlu0 %v494
    %v496 = vpop.xlane.xlu0 %495
    %v497 = vsel %vm290, %v467, 0.0
    %498 = vadd.xlane.f32.xlu0 %v497
    %v499 = vpop.xlane.xlu0 %498
    %v500 = vsel %vm290, %v468, 0.0
    %501 = vadd.xlane.f32.xlu0 %v500
    %v502 = vpop.xlane.xlu0 %501
    %v503 = vsel %vm290, %v469, 0.0
    %504 = vadd.xlane.f32.xlu0 %v503
    %v505 = vpop.xlane.xlu0 %504
    %v506 = vsel %vm290, %v470, 0.0
    %507 = vadd.xlane.f32.xlu0 %v506
    %v508 = vpop.xlane.xlu0 %507
    %v509 = vsel %vm290, %v471, 0.0
    %510 = vadd.xlane.f32.xlu0 %v509
    %v511 = vpop.xlane.xlu0 %510
    %v512 = vsel %vm290, %v472, 0.0
    %513 = vadd.xlane.f32.xlu0 %v512
    %v514 = vpop.xlane.xlu0 %513
    %v515 = vsel %vm290, %v473, 0.0
    %516 = vadd.xlane.f32.xlu0 %v515
    %v517 = vpop.xlane.xlu0 %516
    %v518 = vsel %vm290, %v474, 0.0
    %519 = vadd.xlane.f32.xlu0 %v518
    %v520 = vpop.xlane.xlu0 %519
    %v521 = vsel %vm290, %v475, 0.0
    %522 = vadd.xlane.f32.xlu0 %v521
    %v523 = vpop.xlane.xlu0 %522
    %v524 = vmul.f32 %v414, 0.03125
    %v525 = vmul.f32 %v417, 0.03125
    %v526 = vmul.f32 %v420, 0.03125
    %v527 = vmul.f32 %v423, 0.03125
    %v528 = vmul.f32 %v426, 0.03125
    %v529 = vmul.f32 %v429, 0.03125
    %v530 = vmul.f32 %v432, 0.03125
    %v531 = vmul.f32 %v435, 0.03125
    %v532 = vmul.f32 %v438, 0.03125
    %v533 = vmul.f32 %v441, 0.03125
    %v534 = vmul.f32 %v444, 0.03125
    %v535 = vmul.f32 %v447, 0.03125
    %v536 = vmul.f32 %v450, 0.03125
    %v537 = vmul.f32 %v453, 0.03125
    %v538 = vmul.f32 %v456, 0.03125
    %v539 = vmul.f32 %v459, 0.03125
    %v540 = vmul.f32 %v478, 0.03125
    %v541 = vmul.f32 %v481, 0.03125
    %v542 = vmul.f32 %v484, 0.03125
    %v543 = vmul.f32 %v487, 0.03125
    %v544 = vmul.f32 %v490, 0.03125
    %v545 = vmul.f32 %v493, 0.03125
    %v546 = vmul.f32 %v496, 0.03125
    %v547 = vmul.f32 %v499, 0.03125
    %v548 = vmul.f32 %v502, 0.03125
    %v549 = vmul.f32 %v505, 0.03125
    %v550 = vmul.f32 %v508, 0.03125
    %v551 = vmul.f32 %v511, 0.03125
    %v552 = vmul.f32 %v514, 0.03125
    %v553 = vmul.f32 %v517, 0.03125
    %v554 = vmul.f32 %v520, 0.03125
    %v555 = vmul.f32 %v523, 0.03125
    %v556 = vmul.f32 %v524, %v524
    %v557 = vmul.f32 %v525, %v525
    %v558 = vmul.f32 %v526, %v526
    %v559 = vmul.f32 %v527, %v527
    %v560 = vmul.f32 %v528, %v528
    %v561 = vmul.f32 %v529, %v529
    %v562 = vmul.f32 %v530, %v530
    %v563 = vmul.f32 %v531, %v531
    %v564 = vmul.f32 %v532, %v532
    %v565 = vmul.f32 %v533, %v533
    %v566 = vmul.f32 %v534, %v534
    %v567 = vmul.f32 %v535, %v535
    %v568 = vmul.f32 %v536, %v536
    %v569 = vmul.f32 %v537, %v537
    %v570 = vmul.f32 %v538, %v538
    %v571 = vmul.f32 %v539, %v539
    %v572 = vsub.f32 %v540, %v556
    %v573 = vsub.f32 %v541, %v557
    %v574 = vsub.f32 %v542, %v558
    %v575 = vsub.f32 %v543, %v559
    %v576 = vsub.f32 %v544, %v560
    %v577 = vsub.f32 %v545, %v561
    %v578 = vsub.f32 %v546, %v562
    %v579 = vsub.f32 %v547, %v563
    %v580 = vsub.f32 %v548, %v564
    %v581 = vsub.f32 %v549, %v565
    %v582 = vsub.f32 %v550, %v566
    %v583 = vsub.f32 %v551, %v567
    %v584 = vsub.f32 %v552, %v568
    %v585 = vsub.f32 %v553, %v569
    %v586 = vsub.f32 %v554, %v570
    %v587 = vsub.f32 %v555, %v571
    %v588 = vmax.f32 %v572, 0.0
    %v589 = vmax.f32 %v573, 0.0
    %v590 = vmax.f32 %v574, 0.0
    %v591 = vmax.f32 %v575, 0.0
    %v592 = vmax.f32 %v576, 0.0
    %v593 = vmax.f32 %v577, 0.0
    %v594 = vmax.f32 %v578, 0.0
    %v595 = vmax.f32 %v579, 0.0
    %v596 = vmax.f32 %v580, 0.0
    %v597 = vmax.f32 %v581, 0.0
    %v598 = vmax.f32 %v582, 0.0
    %v599 = vmax.f32 %v583, 0.0
    %v600 = vmax.f32 %v584, 0.0
    %v601 = vmax.f32 %v585, 0.0
    %v602 = vmax.f32 %v586, 0.0
    %v603 = vmax.f32 %v587, 0.0
    %v604 = vsub.f32 %v350, %v524
    %v605 = vsub.f32 %v353, %v525
    %v606 = vsub.f32 %v358, %v526
    %v607 = vsub.f32 %v361, %v527
    %v608 = vsub.f32 %v366, %v528
    %v609 = vsub.f32 %v369, %v529
    %v610 = vsub.f32 %v374, %v530
    %v611 = vsub.f32 %v377, %v531
    %v612 = vsub.f32 %v382, %v532
    %v613 = vsub.f32 %v385, %v533
    %v614 = vsub.f32 %v390, %v534
    %v615 = vsub.f32 %v393, %v535
    %v616 = vsub.f32 %v398, %v536
    %v617 = vsub.f32 %v401, %v537
    %v618 = vsub.f32 %v406, %v538
    %v619 = vsub.f32 %v409, %v539
    %v620 = vadd.f32 %v588, 1e-05
    %v621 = vadd.f32 %v589, 1e-05
    %v622 = vadd.f32 %v590, 1e-05
    %v623 = vadd.f32 %v591, 1e-05
    %v624 = vadd.f32 %v592, 1e-05
    %v625 = vadd.f32 %v593, 1e-05
    %v626 = vadd.f32 %v594, 1e-05
    %v627 = vadd.f32 %v595, 1e-05
    %v628 = vadd.f32 %v596, 1e-05
    %v629 = vadd.f32 %v597, 1e-05
    %v630 = vadd.f32 %v598, 1e-05
    %v631 = vadd.f32 %v599, 1e-05
    %v632 = vadd.f32 %v600, 1e-05
    %v633 = vadd.f32 %v601, 1e-05
    %v634 = vadd.f32 %v602, 1e-05
    %v635 = vadd.f32 %v603, 1e-05
    %v636 = vrsqrt.pop %v620
    %v637 = vrsqrt.pop %v621
    %v638 = vrsqrt.pop %v622
    %v639 = vrsqrt.pop %v623
    %v640 = vrsqrt.pop %v624
    %v641 = vrsqrt.pop %v625
    %v642 = vrsqrt.pop %v626
    %v643 = vrsqrt.pop %v627
    %v644 = vrsqrt.pop %v628
    %v645 = vrsqrt.pop %v629
    %v646 = vrsqrt.pop %v630
    %v647 = vrsqrt.pop %v631
    %v648 = vrsqrt.pop %v632
    %v649 = vrsqrt.pop %v633
    %v650 = vrsqrt.pop %v634
    %v651 = vrsqrt.pop %v635
    %v652 = vmul.f32 %v604, %v636
    %v653 = vmul.f32 %v605, %v637
    %v654 = vmul.f32 %v606, %v638
    %v655 = vmul.f32 %v607, %v639
    %v656 = vmul.f32 %v608, %v640
    %v657 = vmul.f32 %v609, %v641
    %v658 = vmul.f32 %v610, %v642
    %v659 = vmul.f32 %v611, %v643
    %v660 = vmul.f32 %v612, %v644
    %v661 = vmul.f32 %v613, %v645
    %v662 = vmul.f32 %v614, %v646
    %v663 = vmul.f32 %v615, %v647
    %v664 = vmul.f32 %v616, %v648
    %v665 = vmul.f32 %v617, %v649
    %v666 = vmul.f32 %v618, %v650
    %v667 = vmul.f32 %v619, %v651
    %v668 = vld [vmem:[%s5] sm:$0x1]
    %v670 = vlaneseq
    %v671 = vshrl.u32 %v670, 7
    %v672 = vsub.s32 0, %v671
    %v673 = vrot.slane %v668, %v672
    %v675 = vmul.f32 %v652, %v673
    %v676 = vmul.f32 %v653, %v673
    %v677 = vmul.f32 %v654, %v673
    %v678 = vmul.f32 %v655, %v673
    %v679 = vmul.f32 %v656, %v673
    %v680 = vmul.f32 %v657, %v673
    %v681 = vmul.f32 %v658, %v673
    %v682 = vmul.f32 %v659, %v673
    %v683 = vmul.f32 %v660, %v673
    %v684 = vmul.f32 %v661, %v673
    %v685 = vmul.f32 %v662, %v673
    %v686 = vmul.f32 %v663, %v673
    %v687 = vmul.f32 %v664, %v673
    %v688 = vmul.f32 %v665, %v673
    %v689 = vmul.f32 %v666, %v673
    %v690 = vmul.f32 %v667, %v673
    %v691 = vld [vmem:[%s6] sm:$0x1]
    %v693 = vlaneseq
    %v694 = vshrl.u32 %v693, 7
    %v695 = vsub.s32 0, %v694
    %v696 = vrot.slane %v691, %v695
    %v698 = vadd.f32 %v675, %v696
    %v699 = vadd.f32 %v676, %v696
    %v700 = vadd.f32 %v677, %v696
    %v701 = vadd.f32 %v678, %v696
    %v702 = vadd.f32 %v679, %v696
    %v703 = vadd.f32 %v680, %v696
    %v704 = vadd.f32 %v681, %v696
    %v705 = vadd.f32 %v682, %v696
    %v706 = vadd.f32 %v683, %v696
    %v707 = vadd.f32 %v684, %v696
    %v708 = vadd.f32 %v685, %v696
    %v709 = vadd.f32 %v686, %v696
    %v710 = vadd.f32 %v687, %v696
    %v711 = vadd.f32 %v688, %v696
    %v712 = vadd.f32 %v689, %v696
    %v713 = vadd.f32 %v690, %v696
    %v714 = vmul.f32 %v698, 0.5
    %v715 = vmul.f32 %v699, 0.5
    %v716 = vmul.f32 %v700, 0.5
    %v717 = vmul.f32 %v701, 0.5
    %v718 = vmul.f32 %v702, 0.5
    %v719 = vmul.f32 %v703, 0.5
    %v720 = vmul.f32 %v704, 0.5
    %v721 = vmul.f32 %v705, 0.5
    %v722 = vmul.f32 %v706, 0.5
    %v723 = vmul.f32 %v707, 0.5
    %v724 = vmul.f32 %v708, 0.5
    %v725 = vmul.f32 %v709, 0.5
    %v726 = vmul.f32 %v710, 0.5
    %v727 = vmul.f32 %v711, 0.5
    %v728 = vmul.f32 %v712, 0.5
    %v729 = vmul.f32 %v713, 0.5
    %v730 = vtanh.pop %v714
    %v731 = vtanh.pop %v715
    %v732 = vtanh.pop %v716
    %v733 = vtanh.pop %v717
    %v734 = vtanh.pop %v718
    %v735 = vtanh.pop %v719
    %v736 = vtanh.pop %v720
    %v737 = vtanh.pop %v721
    %v738 = vtanh.pop %v722
    %v739 = vtanh.pop %v723
    %v740 = vtanh.pop %v724
    %v741 = vtanh.pop %v725
    %v742 = vtanh.pop %v726
    %v743 = vtanh.pop %v727
    %v744 = vtanh.pop %v728
    %v745 = vtanh.pop %v729
    %v746 = vadd.f32 %v730, 1.0
    %v747 = vadd.f32 %v731, 1.0
    %v748 = vadd.f32 %v732, 1.0
    %v749 = vadd.f32 %v733, 1.0
    %v750 = vadd.f32 %v734, 1.0
    %v751 = vadd.f32 %v735, 1.0
    %v752 = vadd.f32 %v736, 1.0
    %v753 = vadd.f32 %v737, 1.0
    %v754 = vadd.f32 %v738, 1.0
    %v755 = vadd.f32 %v739, 1.0
    %v756 = vadd.f32 %v740, 1.0
    %v757 = vadd.f32 %v741, 1.0
    %v758 = vadd.f32 %v742, 1.0
    %v759 = vadd.f32 %v743, 1.0
    %v760 = vadd.f32 %v744, 1.0
    %v761 = vadd.f32 %v745, 1.0
    %v762 = vmul.f32 %v714, %v746
    %v763 = vmul.f32 %v715, %v747
    %v764 = vmul.f32 %v716, %v748
    %v765 = vmul.f32 %v717, %v749
    %v766 = vmul.f32 %v718, %v750
    %v767 = vmul.f32 %v719, %v751
    %v768 = vmul.f32 %v720, %v752
    %v769 = vmul.f32 %v721, %v753
    %v770 = vmul.f32 %v722, %v754
    %v771 = vmul.f32 %v723, %v755
    %v772 = vmul.f32 %v724, %v756
    %v773 = vmul.f32 %v725, %v757
    %v774 = vmul.f32 %v726, %v758
    %v775 = vmul.f32 %v727, %v759
    %v776 = vmul.f32 %v728, %v760
    %v777 = vmul.f32 %v729, %v761
    %v778 = vpack.c.bf16 %v763, %v762
    %v779 = vpack.c.bf16 %v765, %v764
    %v780 = vpack.c.bf16 %v767, %v766
    %v781 = vpack.c.bf16 %v769, %v768
    %v782 = vpack.c.bf16 %v771, %v770
    %v783 = vpack.c.bf16 %v773, %v772
    %v784 = vpack.c.bf16 %v775, %v774
    %v785 = vpack.c.bf16 %v777, %v776
    %v786 = vld [vmem:[%s7] sm:$0xf]
    %v787 = vld [vmem:[%s7 + $0x4] sm:$0xf]
    %v788 = vld [vmem:[%s7 + $0x8] sm:$0xf]
    %v789 = vld [vmem:[%s7 + $0xc] sm:$0xf]
    %v790 = vld [vmem:[%s8] sm:$0x1]
    %v792 = vlaneseq
    %v793 = vshrl.u32 %v792, 7
    %v794 = vsub.s32 0, %v793
    %v795 = vrot.slane %v790, %v794
    %v801 = vunpack.c.l.b16 %v786
    %v802 = vunpack.c.l.b16 %v787
    %v803 = vunpack.c.l.b16 %v788
    %v804 = vunpack.c.l.b16 %v789
    %v805 = vpack.c.b16 %v802, %v801
    %v806 = vpack.c.b16 %v804, %v803
    %v810 = vsel %vm290, %v778, 0
    %v813 = vsel %vm290, %v779, 0
    %v816 = vsel %vm290, %v780, 0
    %v819 = vsel %vm290, %v781, 0
    %v822 = vsel %vm290, %v782, 0
    %v825 = vsel %vm290, %v783, 0
    %v828 = vsel %vm290, %v784, 0
    %v831 = vsel %vm290, %v785, 0
    %833 = vmatprep.subr.bf16.mxu0 0
    %834 = vmatpush1.bf16.msra.mxu0 %v805
    %835 = vmatprep.subr.bf16.mxu0 0
    %836 = vmatpush1.bf16.msra.mxu0 %v806
    %837 = vmatprep.subr.bf16.mxu0 0
    %838 = vmatpush1.bf16.msra.mxu0 0
    %839 = vmatprep.subr.bf16.mxu0 0
    %840 = vmatpush1.bf16.msra.mxu0 0
    %841 = vmatprep.subr.bf16.mxu0 0
    %842 = vmatpush1.bf16.msra.mxu0 0
    %843 = vmatprep.subr.bf16.mxu0 0
    %844 = vmatpush1.bf16.msra.mxu0 0
    %845 = vmatprep.subr.bf16.mxu0 0
    %846 = vmatpush1.bf16.msra.mxu0 0
    %847 = vmatprep.subr.bf16.mxu0 0
    %848 = vmatpush1.bf16.msra.mxu0 0
    %849 = vmatprep.subr.bf16.mxu0 0
    %850 = vmatpush1.bf16.msra.mxu0 0
    %851 = vmatprep.subr.bf16.mxu0 0
    %852 = vmatpush1.bf16.msra.mxu0 0
    %853 = vmatprep.subr.bf16.mxu0 0
    %854 = vmatpush1.bf16.msra.mxu0 0
    %855 = vmatprep.subr.bf16.mxu0 0
    %856 = vmatpush1.bf16.msra.mxu0 0
    %857 = vmatprep.subr.bf16.mxu0 0
    %858 = vmatpush1.bf16.msra.mxu0 0
    %859 = vmatprep.subr.bf16.mxu0 0
    %860 = vmatpush1.bf16.msra.mxu0 0
    %861 = vmatprep.subr.bf16.mxu0 0
    %862 = vmatpush1.bf16.msra.mxu0 0
    %863 = vmatprep.subr.bf16.mxu0 0
    %864 = vmatpush1.bf16.msra.mxu0 0
    %865 = vmatprep.mubr.bf16.mxu0 0
    %866 = vmatmul.mubr.bf16.gmra.mrb[0].mxu0 %v810
    %v867 = vpop.f32.mrb[0].mxu0
    %v868 = vadd.f32 %v795, %v867
    %v869 = vpop.f32.mrb[0].mxu0
    %v870 = vpop.f32.mrb[0].mxu0
    %v871 = vadd.f32 %v795, %v870
    %v872 = vpop.f32.mrb[0].mxu0
    %873 = vmatprep.mubr.bf16.mxu0 0
    %874 = vmatmul.mubr.bf16.gmra.mrb[0].mxu0 %v813
    %v875 = vpop.f32.mrb[0].mxu0
    %v876 = vadd.f32 %v795, %v875
    %v877 = vpop.f32.mrb[0].mxu0
    %v878 = vpop.f32.mrb[0].mxu0
    %v879 = vadd.f32 %v795, %v878
    %v880 = vpop.f32.mrb[0].mxu0
    %881 = vmatprep.mubr.bf16.mxu0 0
    %882 = vmatmul.mubr.bf16.gmra.mrb[0].mxu0 %v816
    %v883 = vpop.f32.mrb[0].mxu0
    %v884 = vadd.f32 %v795, %v883
    %v885 = vpop.f32.mrb[0].mxu0
    %v886 = vpop.f32.mrb[0].mxu0
    %v887 = vadd.f32 %v795, %v886
    %v888 = vpop.f32.mrb[0].mxu0
    %889 = vmatprep.mubr.bf16.mxu0 0
    %890 = vmatmul.mubr.bf16.gmra.mrb[0].mxu0 %v819
    %v891 = vpop.f32.mrb[0].mxu0
    %v892 = vadd.f32 %v795, %v891
    %v893 = vpop.f32.mrb[0].mxu0
    %v894 = vpop.f32.mrb[0].mxu0
    %v895 = vadd.f32 %v795, %v894
    %v896 = vpop.f32.mrb[0].mxu0
    %897 = vmatprep.mubr.bf16.mxu0 0
    %898 = vmatmul.mubr.bf16.gmra.mrb[0].mxu0 %v822
    %v899 = vpop.f32.mrb[0].mxu0
    %v900 = vadd.f32 %v795, %v899
    %v901 = vpop.f32.mrb[0].mxu0
    %v902 = vpop.f32.mrb[0].mxu0
    %v903 = vadd.f32 %v795, %v902
    %v904 = vpop.f32.mrb[0].mxu0
    %905 = vmatprep.mubr.bf16.mxu0 0
    %906 = vmatmul.mubr.bf16.gmra.mrb[0].mxu0 %v825
    %v907 = vpop.f32.mrb[0].mxu0
    %v908 = vadd.f32 %v795, %v907
    %v909 = vpop.f32.mrb[0].mxu0
    %v910 = vpop.f32.mrb[0].mxu0
    %v911 = vadd.f32 %v795, %v910
    %v912 = vpop.f32.mrb[0].mxu0
    %913 = vmatprep.mubr.bf16.mxu0 0
    %914 = vmatmul.mubr.bf16.gmra.mrb[0].mxu0 %v828
    %v915 = vpop.f32.mrb[0].mxu0
    %v916 = vadd.f32 %v795, %v915
    %v917 = vpop.f32.mrb[0].mxu0
    %v918 = vpop.f32.mrb[0].mxu0
    %v919 = vadd.f32 %v795, %v918
    %v920 = vpop.f32.mrb[0].mxu0
    %921 = vmatprep.mubr.bf16.mxu0 0
    %922 = vmatmul.mubr.bf16.gmra.mrb[0].mxu0 %v831
    %v923 = vpop.f32.mrb[0].mxu0
    %v924 = vadd.f32 %v795, %v923
    %v925 = vpop.f32.mrb[0].mxu0
    %v926 = vpop.f32.mrb[0].mxu0
    %v927 = vadd.f32 %v795, %v926
    %v928 = vpop.f32.mrb[0].mxu0
    %929 = vdwg.mxu0
    %930 = vst [vmem:[#allocation2] sm:$0xff] %v868
    %931 = vst [vmem:[#allocation2 + $0x8] sm:$0xff] %v871
    %932 = vst [vmem:[#allocation2 + $0x10] sm:$0xff] %v876
    %933 = vst [vmem:[#allocation2 + $0x18] sm:$0xff] %v879
    %934 = vst [vmem:[#allocation2 + $0x20] sm:$0xff] %v884
    %935 = vst [vmem:[#allocation2 + $0x28] sm:$0xff] %v887
    %936 = vst [vmem:[#allocation2 + $0x30] sm:$0xff] %v892
    %937 = vst [vmem:[#allocation2 + $0x38] sm:$0xff] %v895
    %938 = vst [vmem:[#allocation2 + $0x40] sm:$0xff] %v900
    %939 = vst [vmem:[#allocation2 + $0x48] sm:$0xff] %v903
    %940 = vst [vmem:[#allocation2 + $0x50] sm:$0xff] %v908
    %941 = vst [vmem:[#allocation2 + $0x58] sm:$0xff] %v911
    %942 = vst [vmem:[#allocation2 + $0x60] sm:$0xff] %v916
    %943 = vst [vmem:[#allocation2 + $0x68] sm:$0xff] %v919
    %944 = vst [vmem:[#allocation2 + $0x70] sm:$0xff] %v924
    %945 = vst [vmem:[#allocation2 + $0x78] sm:$0xff] %v927
    // Predicated region
    $region38: #{tpu_custom_call.1} parent=1 // pred_check
      _
    $region39: #{tpu_custom_call.1} parent=1 // pred_check_branch
      %947 = sbr.rel (0) target = $region41
    $region40: #{tpu_custom_call.1} parent=1 // pred_region
      %s949 = ssub.s32 2048, 1024
      %950 = vsyncadd [#allocation3], %s949
      %s951 = sshll.u32 [#allocation2], 4
      %s952 = int_to_ptr.vmem [resolvable:$true] %s951
      %957 = dma.vmem_to_hbm [thread:$0]  %s952, 1024, %s9, [#allocation3], 128, 128, 8
    $region41: #{tpu_custom_call.1} parent=1 // pred_fallthru
      _
    // Predicated region
    $region42: #{tpu_custom_call.1} parent=1 // pred_check
      _
    $region43: #{tpu_custom_call.1} parent=1 // pred_check_branch
      %959 = sbr.rel (0) target = $region45
    $region44: #{tpu_custom_call.1} parent=1 // pred_region
      %960 = dma.done [#allocation3], 2048
    $region45: #{tpu_custom_call.1} parent=1 // pred_fallthru
      _
    %961 = vsyncpa [#allocation3], 1

</llo_original>
